<compile_context>
chip_gen: v7x
topology: tpu7x:2x2x1
jax: 0.10.0
libtpu: 0.0.40
codegen_flags: <defaults>
</compile_context>

<pallas_src>
import functools

import numpy as np
import jax
import jax.numpy as jnp
from jax.experimental import pallas as pl
from jax.experimental.pallas import tpu as pltpu

VMEM_SPEC = pl.BlockSpec(memory_space=pltpu.MemorySpace.VMEM)

K = 4        # Conv1d kernel size
STRIDE = 2
PAD = 1


# ---------------------------------------------------------------------------
# Fused Pallas kernel: whole VAE forward pass in one invocation (grid=())
# ---------------------------------------------------------------------------
def _vae_fused_kernel(x_ref, eps_ref, c2_ref, c3_ref, fw2_ref,
                      sa_ref, sb_ref, bias_ref, out_ref, *, meta):
    lat = meta["latent"]
    bw = meta["bw"]

    def mm(a, b_bf16):
        # bf16 operands, f32 accumulation on the MXU.
        return jnp.dot(a.astype(jnp.bfloat16), b_bf16,
                       preferred_element_type=jnp.float32)

    def piece(ref, off):
        r, nr, nc = off                      # static, 16-row-aligned offsets
        return ref[r:r + nr, 0:nc]

    def bias(i):
        return bias_ref[i:i + 1, 0:bw[i]]    # (1, w) f32 row, broadcast over B

    # --- encoder: each Conv1d(4, stride 2, pad 1) is ONE matmul with a
    # constant Toeplitz matrix; activations stay flat as (B, L*C),
    # position-major / channel-minor along lanes.
    h = jnp.maximum(mm(x_ref[...], piece(sa_ref, meta["c1"])) + bias(0), 0.0)
    h = jnp.maximum(mm(h, c2_ref[...]) + bias(1), 0.0)
    h = jnp.maximum(mm(h, c3_ref[...]) + bias(2), 0.0)
    h = jnp.maximum(mm(h, piece(sb_ref, meta["c4"])) + bias(3), 0.0)

    # AdaptiveAvgPool1d(1): one constant averaging matmul (identity when L4==1,
    # so it is skipped statically in that case).
    if meta["l4"] > 1:
        h = mm(h, piece(sb_ref, meta["pool"]))
    pooled = h                               # (B, 2*latent) f32

    # --- reparameterization (f32, VPU/EUP) ----------------------------------
    mu = pooled[:, :lat]
    logvar = pooled[:, lat:2 * lat]
    std = jnp.exp(0.5 * logvar)
    z = mu + eps_ref[...] * std              # eps == torch.randn_like(std)

    # --- decoder -------------------------------------------------------------
    d = jnp.tanh(mm(z, piece(sa_ref, meta["fw1"])) + bias(4))
    d = jnp.tanh(mm(d, fw2_ref[...]) + bias(5))
    xr = jnp.tanh(mm(d, piece(sb_ref, meta["fw3"])) + bias(6))

    # single merged store -> one writeback DMA
    out_ref[...] = jnp.concatenate([xr, mu, logvar], axis=1)


# ---------------------------------------------------------------------------
# One-time preparation: Toeplitz conv matrices, bf16 weight slabs, bias slab
# ---------------------------------------------------------------------------
def _conv_toeplitz(w, b, lin):
    """Fold a Conv1d(kernel=4, stride=2, pad=1) into a dense matrix.

    w: (Cout, Cin, K) torch layout.  Returns (Cmat (Lin*Cin, Lout*Cout),
    bias row (Lout*Cout,), Lout), with flat index = position*C + channel.
    """
    cout, cin, ksz = w.shape
    lout = (lin + 2 * PAD - ksz) // STRIDE + 1
    cmat = np.zeros((lin * cin, lout * cout), np.float32)
    for l in range(lout):
        for k in range(ksz):
            j = STRIDE * l + k - PAD
            if 0 <= j < lin:
                cmat[j * cin:(j + 1) * cin, l * cout:(l + 1) * cout] = w[:, :, k].T
    return cmat, np.tile(b, lout), lout


def _pack_bf16(mats):
    """Stack matrices into one bf16 slab; rows padded to multiples of 16."""
    width = max(m.shape[1] for m in mats)
    blocks, offs, r = [], [], 0
    for m in mats:
        nr, nc = m.shape
        nr_pad = ((nr + 15) // 16) * 16
        blk = np.zeros((nr_pad, width), np.float32)
        blk[:nr, :nc] = m
        blocks.append(blk)
        offs.append((r, nr, nc))
        r += nr_pad
    slab = jnp.asarray(np.concatenate(blocks, axis=0), dtype=jnp.bfloat16)
    return slab, offs


def _pack_bias_f32(vecs):
    """All bias rows in one small f32 slab (kept f32 for exact adds)."""
    width = max(v.shape[0] for v in vecs)
    nrows = ((len(vecs) + 7) // 8) * 8
    slab = np.zeros((nrows, width), np.float32)
    widths = []
    for i, v in enumerate(vecs):
        slab[i, :v.shape[0]] = v
        widths.append(int(v.shape[0]))
    return jnp.asarray(slab), tuple(widths)


def prepare_vae(params, latent, seq):
    assert seq % 16 == 0, "4 stride-2 convs need seq divisible by 16"

    def np_pair(name):
        w, b = params[name]
        return np.asarray(w), np.asarray(b)

    w1, b1 = np_pair("conv1")
    w2, b2 = np_pair("conv2")
    w3, b3 = np_pair("conv3")
    w4, b4 = np_pair("conv4")
    fw1, fb1 = (np.asarray(a) for a in params["fc1"])
    fw2, fb2 = (np.asarray(a) for a in params["fc2"])
    fw3, fb3 = (np.asarray(a) for a in params["fc3"])

    c1, br1, l1 = _conv_toeplitz(w1, b1, seq)
    c2, br2, l2 = _conv_toeplitz(w2, b2, l1)
    c3, br3, l3 = _conv_toeplitz(w3, b3, l2)
    c4, br4, l4 = _conv_toeplitz(w4, b4, l3)

    c4ch = 2 * latent
    pool = np.tile(np.eye(c4ch, dtype=np.float32), (l4, 1)) / float(l4)
    out_dim = int(fw3.shape[1])

    slab_a, offs_a = _pack_bf16([c1, fw1])            # conv1 + fc1
    slab_b, offs_b = _pack_bf16([c4, fw3, pool])      # conv4 + fc3 + pool
    bias_slab, bw = _pack_bias_f32([br1, br2, br3, br4, fb1, fb2, fb3])

    prep = dict(
        c2=jnp.asarray(c2, jnp.bfloat16),
        c3=jnp.asarray(c3, jnp.bfloat16),
        fw2=jnp.asarray(fw2, jnp.bfloat16),
        slab_a=slab_a, slab_b=slab_b, bias=bias_slab)
    meta = dict(latent=int(latent), out_dim=out_dim, l4=int(l4),
                c1=offs_a[0], fw1=offs_a[1],
                c4=offs_b[0], fw3=offs_b[1], pool=offs_b[2],
                bw=bw)
    return prep, meta


# ---------------------------------------------------------------------------
# Forward pass (matches VAE.forward)
# ---------------------------------------------------------------------------
def vae_forward(prep, x_ncl, eps, *, meta):
    B, C, seq = x_ncl.shape                  # C == 1
    od, lat = meta["out_dim"], meta["latent"]

    xs = x_ncl.reshape(B, seq)               # drop unit channel dim (free)

    out = pl.pallas_call(
        functools.partial(_vae_fused_kernel, meta=meta),
        out_shape=jax.ShapeDtypeStruct((B, od + 2 * lat), jnp.float32),
        in_specs=[VMEM_SPEC] * 8,
        out_specs=VMEM_SPEC,
    )(xs, eps, prep["c2"], prep["c3"], prep["fw2"],
      prep["slab_a"], prep["slab_b"], prep["bias"])

    xrec = out[:, :od].reshape(x_ncl.shape)  # xrec.view(x.size())
    mu = out[:, od:od + lat]
    logvar = out[:, od + lat:]
    return xrec, mu, logvar


# ---------------------------------------------------------------------------
# Parameter init (mirrors the torch module's weights_init + defaults)
# ---------------------------------------------------------------------------
def init_params(key, latent, output_dim):
    ks = jax.random.split(key, 7)

    def conv_p(k, cin, cout, ksz=K):
        kw, kb = jax.random.split(k)
        w = 0.02 * jax.random.normal(kw, (cout, cin, ksz), jnp.float32)   # N(0, 0.02)
        bound = 1.0 / float(np.sqrt(cin * ksz))
        b = jax.random.uniform(kb, (cout,), jnp.float32, -bound, bound)   # torch default bias
        return w, b

    def lin_p(k, fin, fout):
        limit = float(np.sqrt(6.0 / (fin + fout)))                        # xavier_uniform_
        w = jax.random.uniform(k, (fin, fout), jnp.float32, -limit, limit)
        b = jnp.zeros((fout,), jnp.float32)                               # bias.fill_(0)
        return w, b

    return {
        "conv1": conv_p(ks[0], 1, 64),
        "conv2": conv_p(ks[1], 64, 128),
        "conv3": conv_p(ks[2], 128, 128),
        "conv4": conv_p(ks[3], 128, 2 * latent),
        "fc1": lin_p(ks[4], latent, 256),
        "fc2": lin_p(ks[5], 256, 512),
        "fc3": lin_p(ks[6], 512, output_dim),
    }


if __name__ == "__main__":
    LATENT = 8
    SEQ = 16                  # xrec.view(x.size()) requires output_dim == 1*SEQ
    OUTPUT_DIM = SEQ
    B = 2

    key = jax.random.PRNGKey(0)
    kp, kx, ke = jax.random.split(key, 3)
    params = init_params(kp, LATENT, OUTPUT_DIM)
    prep, meta = prepare_vae(params, LATENT, SEQ)

    x = jax.random.normal(kx, (B, 1, SEQ), jnp.float32)    # NCL, like torch Conv1d input
    eps = jax.random.normal(ke, (B, LATENT), jnp.float32)  # torch.randn_like(std)

    fwd = jax.jit(functools.partial(vae_forward, meta=meta))
    xrec, mu, logvar = fwd(prep, x, eps)
    jax.block_until_ready((xrec, mu, logvar))

    assert xrec.shape == x.shape
    assert mu.shape == (B, LATENT) and logvar.shape == (B, LATENT)
    assert bool(jnp.all(jnp.isfinite(xrec))) and bool(jnp.all(jnp.isfinite(mu)))
    assert bool(jnp.all(jnp.isfinite(logvar)))
    print("KERNEL_OK")
</pallas_src>

<mosaic_0001>
module attributes {stable_mosaic.version = 11 : i64} {
  func.func @_vae_fused_kernel(%arg0: memref<2x16xf32, #tpu.memory_space<vmem>>, %arg1: memref<2x8xf32, #tpu.memory_space<vmem>>, %arg2: memref<512x512xbf16, #tpu.memory_space<vmem>>, %arg3: memref<512x256xbf16, #tpu.memory_space<vmem>>, %arg4: memref<256x512xbf16, #tpu.memory_space<vmem>>, %arg5: memref<32x512xbf16, #tpu.memory_space<vmem>>, %arg6: memref<784x16xbf16, #tpu.memory_space<vmem>>, %arg7: memref<8x512xf32, #tpu.memory_space<vmem>>, %arg8: memref<2x32xf32, #tpu.memory_space<vmem>>) attributes {dimension_semantics = [], scalar_prefetch = 0 : i64, scratch_operands = 0 : i64, tpu.core_type = #tpu.core_type<tc>} {
    %c0 = arith.constant 0 : index
    %c0_0 = arith.constant 0 : index
    %0 = vector.load %arg0[%c0, %c0_0] : memref<2x16xf32, #tpu.memory_space<vmem>>, vector<2x16xf32>
    %c0_1 = arith.constant 0 : index
    %c0_2 = arith.constant 0 : index
    %1 = vector.load %arg5[%c0_1, %c0_2] : memref<32x512xbf16, #tpu.memory_space<vmem>>, vector<16x512xbf16>
    %2 = arith.truncf %0 : vector<2x16xf32> to vector<2x16xbf16>
    %cst = arith.constant dense<0.000000e+00> : vector<2x512xf32>
    %3 = tpu.matmul %2, %1, %cst {dimension_numbers = #tpu.dot_dimension_numbers<[1], [0], [0], [1], [0, 0, 1, 1], [], []>} : vector<2x16xbf16>, vector<16x512xbf16>, vector<2x512xf32> -> vector<2x512xf32>
    %c0_3 = arith.constant 0 : index
    %c0_4 = arith.constant 0 : index
    %4 = vector.load %arg7[%c0_3, %c0_4] : memref<8x512xf32, #tpu.memory_space<vmem>>, vector<1x512xf32>
    %5 = vector.broadcast %4 : vector<1x512xf32> to vector<2x512xf32>
    %6 = arith.addf %3, %5 : vector<2x512xf32>
    %cst_5 = arith.constant 0.000000e+00 : f32
    %7 = vector.broadcast %cst_5 : f32 to vector<2x512xf32>
    %8 = arith.maximumf %6, %7 : vector<2x512xf32>
    %c0_6 = arith.constant 0 : index
    %c0_7 = arith.constant 0 : index
    %9 = vector.load %arg2[%c0_6, %c0_7] : memref<512x512xbf16, #tpu.memory_space<vmem>>, vector<512x512xbf16>
    %10 = arith.truncf %8 : vector<2x512xf32> to vector<2x512xbf16>
    %cst_8 = arith.constant dense<0.000000e+00> : vector<2x512xf32>
    %11 = tpu.matmul %10, %9, %cst_8 {dimension_numbers = #tpu.dot_dimension_numbers<[1], [0], [0], [1], [0, 0, 1, 1], [], []>} : vector<2x512xbf16>, vector<512x512xbf16>, vector<2x512xf32> -> vector<2x512xf32>
    %c1 = arith.constant 1 : index
    %c0_9 = arith.constant 0 : index
    %12 = vector.load %arg7[%c1, %c0_9] : memref<8x512xf32, #tpu.memory_space<vmem>>, vector<1x512xf32>
    %13 = vector.broadcast %12 : vector<1x512xf32> to vector<2x512xf32>
    %14 = arith.addf %11, %13 : vector<2x512xf32>
    %cst_10 = arith.constant 0.000000e+00 : f32
    %15 = vector.broadcast %cst_10 : f32 to vector<2x512xf32>
    %16 = arith.maximumf %14, %15 : vector<2x512xf32>
    %c0_11 = arith.constant 0 : index
    %c0_12 = arith.constant 0 : index
    %17 = vector.load %arg3[%c0_11, %c0_12] : memref<512x256xbf16, #tpu.memory_space<vmem>>, vector<512x256xbf16>
    %18 = arith.truncf %16 : vector<2x512xf32> to vector<2x512xbf16>
    %cst_13 = arith.constant dense<0.000000e+00> : vector<2x256xf32>
    %19 = tpu.matmul %18, %17, %cst_13 {dimension_numbers = #tpu.dot_dimension_numbers<[1], [0], [0], [1], [0, 0, 1, 1], [], []>} : vector<2x512xbf16>, vector<512x256xbf16>, vector<2x256xf32> -> vector<2x256xf32>
    %c2 = arith.constant 2 : index
    %c0_14 = arith.constant 0 : index
    %20 = vector.load %arg7[%c2, %c0_14] : memref<8x512xf32, #tpu.memory_space<vmem>>, vector<1x256xf32>
    %21 = vector.broadcast %20 : vector<1x256xf32> to vector<2x256xf32>
    %22 = arith.addf %19, %21 : vector<2x256xf32>
    %cst_15 = arith.constant 0.000000e+00 : f32
    %23 = vector.broadcast %cst_15 : f32 to vector<2x256xf32>
    %24 = arith.maximumf %22, %23 : vector<2x256xf32>
    %c0_16 = arith.constant 0 : index
    %c0_17 = arith.constant 0 : index
    %25 = vector.load %arg6[%c0_16, %c0_17] : memref<784x16xbf16, #tpu.memory_space<vmem>>, vector<256x16xbf16>
    %26 = arith.truncf %24 : vector<2x256xf32> to vector<2x256xbf16>
    %cst_18 = arith.constant dense<0.000000e+00> : vector<2x16xf32>
    %27 = tpu.matmul %26, %25, %cst_18 {dimension_numbers = #tpu.dot_dimension_numbers<[1], [0], [0], [1], [0, 0, 1, 1], [], []>} : vector<2x256xbf16>, vector<256x16xbf16>, vector<2x16xf32> -> vector<2x16xf32>
    %c3 = arith.constant 3 : index
    %c0_19 = arith.constant 0 : index
    %28 = vector.load %arg7[%c3, %c0_19] : memref<8x512xf32, #tpu.memory_space<vmem>>, vector<1x16xf32>
    %29 = vector.broadcast %28 : vector<1x16xf32> to vector<2x16xf32>
    %30 = arith.addf %27, %29 : vector<2x16xf32>
    %cst_20 = arith.constant 0.000000e+00 : f32
    %31 = vector.broadcast %cst_20 : f32 to vector<2x16xf32>
    %32 = arith.maximumf %30, %31 : vector<2x16xf32>
    %33 = vector.extract_strided_slice %32 {offsets = [0, 0], sizes = [2, 8], strides = [1, 1]} : vector<2x16xf32> to vector<2x8xf32>
    %34 = vector.extract_strided_slice %32 {offsets = [0, 8], sizes = [2, 8], strides = [1, 1]} : vector<2x16xf32> to vector<2x8xf32>
    %cst_21 = arith.constant 5.000000e-01 : f32
    %35 = vector.broadcast %cst_21 : f32 to vector<2x8xf32>
    %36 = arith.mulf %35, %34 : vector<2x8xf32>
    %37 = math.exp %36 : vector<2x8xf32>
    %c0_22 = arith.constant 0 : index
    %c0_23 = arith.constant 0 : index
    %38 = vector.load %arg1[%c0_22, %c0_23] : memref<2x8xf32, #tpu.memory_space<vmem>>, vector<2x8xf32>
    %39 = arith.mulf %38, %37 : vector<2x8xf32>
    %40 = arith.addf %33, %39 : vector<2x8xf32>
    %c16 = arith.constant 16 : index
    %c0_24 = arith.constant 0 : index
    %41 = vector.load %arg5[%c16, %c0_24] : memref<32x512xbf16, #tpu.memory_space<vmem>>, vector<8x256xbf16>
    %42 = arith.truncf %40 : vector<2x8xf32> to vector<2x8xbf16>
    %cst_25 = arith.constant dense<0.000000e+00> : vector<2x256xf32>
    %43 = tpu.matmul %42, %41, %cst_25 {dimension_numbers = #tpu.dot_dimension_numbers<[1], [0], [0], [1], [0, 0, 1, 1], [], []>} : vector<2x8xbf16>, vector<8x256xbf16>, vector<2x256xf32> -> vector<2x256xf32>
    %c4 = arith.constant 4 : index
    %c0_26 = arith.constant 0 : index
    %44 = vector.load %arg7[%c4, %c0_26] : memref<8x512xf32, #tpu.memory_space<vmem>>, vector<1x256xf32>
    %45 = vector.broadcast %44 : vector<1x256xf32> to vector<2x256xf32>
    %46 = arith.addf %43, %45 : vector<2x256xf32>
    %47 = math.tanh %46 : vector<2x256xf32>
    %c0_27 = arith.constant 0 : index
    %c0_28 = arith.constant 0 : index
    %48 = vector.load %arg4[%c0_27, %c0_28] : memref<256x512xbf16, #tpu.memory_space<vmem>>, vector<256x512xbf16>
    %49 = arith.truncf %47 : vector<2x256xf32> to vector<2x256xbf16>
    %cst_29 = arith.constant dense<0.000000e+00> : vector<2x512xf32>
    %50 = tpu.matmul %49, %48, %cst_29 {dimension_numbers = #tpu.dot_dimension_numbers<[1], [0], [0], [1], [0, 0, 1, 1], [], []>} : vector<2x256xbf16>, vector<256x512xbf16>, vector<2x512xf32> -> vector<2x512xf32>
    %c5 = arith.constant 5 : index
    %c0_30 = arith.constant 0 : index
    %51 = vector.load %arg7[%c5, %c0_30] : memref<8x512xf32, #tpu.memory_space<vmem>>, vector<1x512xf32>
    %52 = vector.broadcast %51 : vector<1x512xf32> to vector<2x512xf32>
    %53 = arith.addf %50, %52 : vector<2x512xf32>
    %54 = math.tanh %53 : vector<2x512xf32>
    %c256 = arith.constant 256 : index
    %c0_31 = arith.constant 0 : index
    %55 = vector.load %arg6[%c256, %c0_31] : memref<784x16xbf16, #tpu.memory_space<vmem>>, vector<512x16xbf16>
    %56 = arith.truncf %54 : vector<2x512xf32> to vector<2x512xbf16>
    %cst_32 = arith.constant dense<0.000000e+00> : vector<2x16xf32>
    %57 = tpu.matmul %56, %55, %cst_32 {dimension_numbers = #tpu.dot_dimension_numbers<[1], [0], [0], [1], [0, 0, 1, 1], [], []>} : vector<2x512xbf16>, vector<512x16xbf16>, vector<2x16xf32> -> vector<2x16xf32>
    %c6 = arith.constant 6 : index
    %c0_33 = arith.constant 0 : index
    %58 = vector.load %arg7[%c6, %c0_33] : memref<8x512xf32, #tpu.memory_space<vmem>>, vector<1x16xf32>
    %59 = vector.broadcast %58 : vector<1x16xf32> to vector<2x16xf32>
    %60 = arith.addf %57, %59 : vector<2x16xf32>
    %61 = math.tanh %60 : vector<2x16xf32>
    %62 = tpu.concatenate %61, %33, %34 in 1 : vector<2x16xf32>, vector<2x8xf32>, vector<2x8xf32> -> vector<2x32xf32>
    %c0_34 = arith.constant 0 : index
    %c0_35 = arith.constant 0 : index
    %63 = vector.load %arg8[%c0_34, %c0_35] : memref<2x32xf32, #tpu.memory_space<vmem>>, vector<2x32xf32>
    tpu.vector_store %arg8[%c0_34, %c0_35], %62 {strides = array<i32>} : memref<2x32xf32, #tpu.memory_space<vmem>>, vector<2x32xf32>,
    return
  }
}

</mosaic_0001>

<llo_original>
// kernel: vae_forward.1
$region0: #{vae_forward.1}
  #allocation0 [shape = 'u32[]', space=smem, size = 0x4, offset = 0x4, fixed_abs, tag = 'smem constant byte address 0x4 - core index']
  #allocation1 [shape = 'u32[144,128]{1,0:T(1,128)}', space=vmem, size = 0x12000, scoped, tag = 'internal scratch']
  %s0 = inlined_call_operand.vmem [shape: f32[2,16], index: 0, kind: input, shape index: {}]
  %s1 = inlined_call_operand.vmem [shape: f32[2,8], index: 1, kind: input, shape index: {}]
  %s2 = inlined_call_operand.hbm [shape: bf16[512,512], index: 2, kind: input, shape index: {}]
  %s3 = inlined_call_operand.hbm [shape: bf16[512,256], index: 3, kind: input, shape index: {}]
  %s4 = inlined_call_operand.hbm [shape: bf16[256,512], index: 4, kind: input, shape index: {}]
  %s5 = inlined_call_operand.vmem [shape: bf16[32,512], index: 5, kind: input, shape index: {}]
  %s6 = inlined_call_operand.vmem [shape: bf16[784,16], index: 6, kind: input, shape index: {}]
  %s7 = inlined_call_operand.vmem [shape: f32[8,512], index: 7, kind: input, shape index: {}]
  %s8 = inlined_call_operand.vmem [shape: f32[2,32], index: 8, kind: output, shape index: {}]
  %s9 = sld [smem:[#allocation0]]
  $region54: #{vae_forward.1} parent=0
    _
  %s11 = ssub.s32 1, %s9
  %s12 = scalar_select 0, %s11, %s9
  $region1: #{vae_forward.1} parent=0
    #allocation2 [shape = 'u8[524288]{0}', space=vmem, size = 0x80000, scoped, tag = 'input window, operand 2, single buffered']
    #allocation3 [shape = 's32[1]{0}', space=sflag, size = 0x4, scoped, tag = 'scoped memory for vae_forward.1']
    #allocation4 [shape = 'u8[262144]{0}', space=vmem, size = 0x40000, scoped, tag = 'input window, operand 3, single buffered']
    #allocation5 [shape = 's32[1]{0}', space=sflag, size = 0x4, scoped, tag = 'scoped memory for vae_forward.1']
    #allocation6 [shape = 'u8[262144]{0}', space=vmem, size = 0x40000, scoped, tag = 'input window, operand 4, single buffered']
    %13 = vsyncpa [#allocation3], 0
    %14 = vsyncpa [#allocation5], 0
    // Predicated region
    $region2: #{vae_forward.1} parent=1 // pred_check
      _
    $region3: #{vae_forward.1} parent=1 // pred_check_branch
      %16 = sbr.rel (0) target = $region5
    $region4: #{vae_forward.1} parent=1 // pred_region
      _
    $region5: #{vae_forward.1} parent=1 // pred_fallthru
      _
    // Predicated region
    $region6: #{vae_forward.1} parent=1 // pred_check
      _
    $region7: #{vae_forward.1} parent=1 // pred_check_branch
      %18 = sbr.rel (0) target = $region9
    $region8: #{vae_forward.1} parent=1 // pred_region
      _
    $region9: #{vae_forward.1} parent=1 // pred_fallthru
      _
    // Predicated region
    $region10: #{vae_forward.1} parent=1 // pred_check
      _
    $region11: #{vae_forward.1} parent=1 // pred_check_branch
      %20 = sbr.rel (0) target = $region13
    $region12: #{vae_forward.1} parent=1 // pred_region
      %s22 = ssub.s32 16384, 16384
      %23 = vsyncadd [#allocation3], %s22
      %s24 = sshll.u32 [#allocation2], 4
      %s25 = int_to_ptr.vmem [resolvable:$true] %s24
      %30 = dma.hbm_to_vmem [thread:$0]  %s2, 16384, %s25, [#allocation3], 256, 256, 16
    $region13: #{vae_forward.1} parent=1 // pred_fallthru
      _
    // Predicated region
    $region14: #{vae_forward.1} parent=1 // pred_check
      _
    $region15: #{vae_forward.1} parent=1 // pred_check_branch
      %32 = sbr.rel (0) target = $region17
    $region16: #{vae_forward.1} parent=1 // pred_region
      %s34 = ssub.s32 8192, 8192
      %35 = vsyncadd [#allocation5], %s34
      %s36 = sshll.u32 [#allocation4], 4
      %s37 = int_to_ptr.vmem [resolvable:$true] %s36
      %42 = dma.hbm_to_vmem [thread:$0]  %s3, 8192, %s37, [#allocation5], 128, 128, 8
    $region17: #{vae_forward.1} parent=1 // pred_fallthru
      _
    // Predicated region
    $region18: #{vae_forward.1} parent=1 // pred_check
      _
    $region19: #{vae_forward.1} parent=1 // pred_check_branch
      %44 = sbr.rel (0) target = $region21
    $region20: #{vae_forward.1} parent=1 // pred_region
      %s46 = ssub.s32 8192, 8192
      %47 = vsyncadd [#allocation5], %s46
      %s48 = sshll.u32 [#allocation6], 4
      %s49 = int_to_ptr.vmem [resolvable:$true] %s48
      %54 = dma.hbm_to_vmem [thread:$0]  %s4, 8192, %s49, [#allocation5], 256, 256, 16
    $region21: #{vae_forward.1} parent=1 // pred_fallthru
      _
    // Predicated region
    $region22: #{vae_forward.1} parent=1 // pred_check
      _
    $region23: #{vae_forward.1} parent=1 // pred_check_branch
      %56 = sbr.rel (0) target = $region25
    $region24: #{vae_forward.1} parent=1 // pred_region
      _
    $region25: #{vae_forward.1} parent=1 // pred_fallthru
      _
    // Predicated region
    $region26: #{vae_forward.1} parent=1 // pred_check
      _
    $region27: #{vae_forward.1} parent=1 // pred_check_branch
      %58 = sbr.rel (0) target = $region29
    $region28: #{vae_forward.1} parent=1 // pred_region
      _
    $region29: #{vae_forward.1} parent=1 // pred_fallthru
      _
    // Predicated region
    $region30: #{vae_forward.1} parent=1 // pred_check
      _
    $region31: #{vae_forward.1} parent=1 // pred_check_branch
      %60 = sbr.rel (0) target = $region33
    $region32: #{vae_forward.1} parent=1 // pred_region
      _
    $region33: #{vae_forward.1} parent=1 // pred_fallthru
      _
    // Predicated region
    $region34: #{vae_forward.1} parent=1 // pred_check
      _
    $region35: #{vae_forward.1} parent=1 // pred_check_branch
      %62 = sbr.rel (0) target = $region37
    $region36: #{vae_forward.1} parent=1 // pred_region
      %63 = dma.done [#allocation3], 16384
    $region37: #{vae_forward.1} parent=1 // pred_fallthru
      _
    // Predicated region
    $region38: #{vae_forward.1} parent=1 // pred_check
      _
    $region39: #{vae_forward.1} parent=1 // pred_check_branch
      %65 = sbr.rel (0) target = $region41
    $region40: #{vae_forward.1} parent=1 // pred_region
      %66 = dma.done [#allocation5], 8192
    $region41: #{vae_forward.1} parent=1 // pred_fallthru
      _
    // Predicated region
    $region42: #{vae_forward.1} parent=1 // pred_check
      _
    $region43: #{vae_forward.1} parent=1 // pred_check_branch
      %68 = sbr.rel (0) target = $region45
    $region44: #{vae_forward.1} parent=1 // pred_region
      %69 = dma.done [#allocation5], 8192
    $region45: #{vae_forward.1} parent=1 // pred_fallthru
      _
    %v71 = vld [vmem:[%s0] sm:$0x3]
    %v72 = vld [vmem:[%s5] sm:$0xff]
    %v73 = vld [vmem:[%s5 + $0x8] sm:$0xff]
    %v74 = vld [vmem:[%s5 + $0x10] sm:$0xff]
    %v75 = vld [vmem:[%s5 + $0x18] sm:$0xff]
    %v76 = vpack.c.bf16 %v71, %v71
    %v77 = vld [vmem:[%s7] ss:$8 sm:$0xf]
    %v79 = vlaneseq
    %v80 = vshrl.u32 %v79, 7
    %v81 = vsub.s32 0, %v80
    %v82 = vrot.slane %v77, %v81
    %v83 = vlaneseq
    %v84 = vshrl.u32 %v83, 7
    %v85 = vsub.s32 1, %v84
    %v86 = vrot.slane %v77, %v85
    %v87 = vlaneseq
    %v88 = vshrl.u32 %v87, 7
    %v89 = vsub.s32 2, %v88
    %v90 = vrot.slane %v77, %v89
    %v91 = vlaneseq
    %v92 = vshrl.u32 %v91, 7
    %v93 = vsub.s32 3, %v92
    %v94 = vrot.slane %v77, %v93
    %v103 = vunpack.c.l.b16 %v72
    %v104 = vunpack.c.h.b16 %v72
    %v105 = vunpack.c.l.b16 %v73
    %v106 = vunpack.c.h.b16 %v73
    %v107 = vunpack.c.l.b16 %v74
    %v108 = vunpack.c.h.b16 %v74
    %v109 = vunpack.c.l.b16 %v75
    %v110 = vunpack.c.h.b16 %v75
    %v111 = vpack.c.b16 %v107, %v103
    %v112 = vpack.c.b16 %v108, %v104
    %v113 = vpack.c.b16 %v109, %v105
    %v114 = vpack.c.b16 %v110, %v106
    %vm119 = vcmask 130048
    %v121 = vsel %vm119, %v76, 0
    %123 = vmatprep.subr.bf16.mxu0 %v112
    %124 = vmatpush1.bf16.msra.mxu0 %v111
    %125 = vmatprep.subr.bf16.mxu0 0
    %126 = vmatpush1.bf16.msra.mxu0 0
    %127 = vmatprep.subr.bf16.mxu0 0
    %128 = vmatpush1.bf16.msra.mxu0 0
    %129 = vmatprep.subr.bf16.mxu0 0
    %130 = vmatpush1.bf16.msra.mxu0 0
    %131 = vmatprep.subr.bf16.mxu0 0
    %132 = vmatpush1.bf16.msra.mxu0 0
    %133 = vmatprep.subr.bf16.mxu0 0
    %134 = vmatpush1.bf16.msra.mxu0 0
    %135 = vmatprep.subr.bf16.mxu0 0
    %136 = vmatpush1.bf16.msra.mxu0 0
    %137 = vmatprep.subr.bf16.mxu0 0
    %138 = vmatpush1.bf16.msra.mxu0 0
    %139 = vmatprep.subr.bf16.mxu0 0
    %140 = vmatpush1.bf16.msra.mxu0 0
    %141 = vmatprep.subr.bf16.mxu0 0
    %142 = vmatpush1.bf16.msra.mxu0 0
    %143 = vmatprep.subr.bf16.mxu0 0
    %144 = vmatpush1.bf16.msra.mxu0 0
    %145 = vmatprep.subr.bf16.mxu0 0
    %146 = vmatpush1.bf16.msra.mxu0 0
    %147 = vmatprep.subr.bf16.mxu0 0
    %148 = vmatpush1.bf16.msra.mxu0 0
    %149 = vmatprep.subr.bf16.mxu0 0
    %150 = vmatpush1.bf16.msra.mxu0 0
    %151 = vmatprep.subr.bf16.mxu0 0
    %152 = vmatpush1.bf16.msra.mxu0 0
    %153 = vmatprep.subr.bf16.mxu0 0
    %154 = vmatpush1.bf16.msra.mxu0 0
    %155 = vmatprep.mubr.bf16.mxu0 0
    %156 = vmatmul.mubr.bf16.gmra.mrb[0].mxu0 %v121
    %v157 = vpop.f32.mrb[0].mxu0
    %v158 = vadd.f32 %v82, %v157
    %v159 = vpop.f32.mrb[0].mxu0
    %v160 = vadd.f32 %v86, %v159
    %v161 = vpop.f32.mrb[0].mxu0
    %v162 = vpop.f32.mrb[0].mxu0
    %163 = vdwg.mxu0
    %164 = vmatprep.subr.bf16.mxu0 %v114
    %165 = vmatpush1.bf16.msra.mxu0 %v113
    %166 = vmatprep.subr.bf16.mxu0 0
    %167 = vmatpush1.bf16.msra.mxu0 0
    %168 = vmatprep.subr.bf16.mxu0 0
    %169 = vmatpush1.bf16.msra.mxu0 0
    %170 = vmatprep.subr.bf16.mxu0 0
    %171 = vmatpush1.bf16.msra.mxu0 0
    %172 = vmatprep.subr.bf16.mxu0 0
    %173 = vmatpush1.bf16.msra.mxu0 0
    %174 = vmatprep.subr.bf16.mxu0 0
    %175 = vmatpush1.bf16.msra.mxu0 0
    %176 = vmatprep.subr.bf16.mxu0 0
    %177 = vmatpush1.bf16.msra.mxu0 0
    %178 = vmatprep.subr.bf16.mxu0 0
    %179 = vmatpush1.bf16.msra.mxu0 0
    %180 = vmatprep.subr.bf16.mxu0 0
    %181 = vmatpush1.bf16.msra.mxu0 0
    %182 = vmatprep.subr.bf16.mxu0 0
    %183 = vmatpush1.bf16.msra.mxu0 0
    %184 = vmatprep.subr.bf16.mxu0 0
    %185 = vmatpush1.bf16.msra.mxu0 0
    %186 = vmatprep.subr.bf16.mxu0 0
    %187 = vmatpush1.bf16.msra.mxu0 0
    %188 = vmatprep.subr.bf16.mxu0 0
    %189 = vmatpush1.bf16.msra.mxu0 0
    %190 = vmatprep.subr.bf16.mxu0 0
    %191 = vmatpush1.bf16.msra.mxu0 0
    %192 = vmatprep.subr.bf16.mxu0 0
    %193 = vmatpush1.bf16.msra.mxu0 0
    %194 = vmatprep.subr.bf16.mxu0 0
    %195 = vmatpush1.bf16.msra.mxu0 0
    %196 = vmatprep.mubr.bf16.mxu0 0
    %197 = vmatmul.mubr.bf16.gmra.mrb[0].mxu0 %v121
    %v198 = vpop.f32.mrb[0].mxu0
    %v199 = vadd.f32 %v90, %v198
    %v200 = vpop.f32.mrb[0].mxu0
    %v201 = vadd.f32 %v94, %v200
    %v202 = vpop.f32.mrb[0].mxu0
    %v203 = vpop.f32.mrb[0].mxu0
    %204 = vdwg.mxu0
    %v205 = vmax.f32 %v158, 0.0
    %v206 = vmax.f32 %v160, 0.0
    %v207 = vmax.f32 %v199, 0.0
    %v208 = vmax.f32 %v201, 0.0
    %v209 = vld [vmem:[#allocation2] sm:$0xff]
    %v210 = vld [vmem:[#allocation2 + $0x8] sm:$0xff]
    %v211 = vld [vmem:[#allocation2 + $0x10] sm:$0xff]
    %v212 = vld [vmem:[#allocation2 + $0x18] sm:$0xff]
    %v213 = vld [vmem:[#allocation2 + $0x20] sm:$0xff]
    %v214 = vld [vmem:[#allocation2 + $0x28] sm:$0xff]
    %v215 = vld [vmem:[#allocation2 + $0x30] sm:$0xff]
    %v216 = vld [vmem:[#allocation2 + $0x38] sm:$0xff]
    %v217 = vld [vmem:[#allocation2 + $0x40] sm:$0xff]
    %v218 = vld [vmem:[#allocation2 + $0x48] sm:$0xff]
    %v219 = vld [vmem:[#allocation2 + $0x50] sm:$0xff]
    %v220 = vld [vmem:[#allocation2 + $0x58] sm:$0xff]
    %v221 = vld [vmem:[#allocation2 + $0x60] sm:$0xff]
    %v222 = vld [vmem:[#allocation2 + $0x68] sm:$0xff]
    %v223 = vld [vmem:[#allocation2 + $0x70] sm:$0xff]
    %v224 = vld [vmem:[#allocation2 + $0x78] sm:$0xff]
    %v225 = vld [vmem:[#allocation2 + $0x80] sm:$0xff]
    %v226 = vld [vmem:[#allocation2 + $0x88] sm:$0xff]
    %v227 = vld [vmem:[#allocation2 + $0x90] sm:$0xff]
    %v228 = vld [vmem:[#allocation2 + $0x98] sm:$0xff]
    %v229 = vld [vmem:[#allocation2 + $0xa0] sm:$0xff]
    %v230 = vld [vmem:[#allocation2 + $0xa8] sm:$0xff]
    %v231 = vld [vmem:[#allocation2 + $0xb0] sm:$0xff]
    %v232 = vld [vmem:[#allocation2 + $0xb8] sm:$0xff]
    %v233 = vld [vmem:[#allocation2 + $0xc0] sm:$0xff]
    %v234 = vld [vmem:[#allocation2 + $0xc8] sm:$0xff]
    %v235 = vld [vmem:[#allocation2 + $0xd0] sm:$0xff]
    %v236 = vld [vmem:[#allocation2 + $0xd8] sm:$0xff]
    %v237 = vld [vmem:[#allocation2 + $0xe0] sm:$0xff]
    %v238 = vld [vmem:[#allocation2 + $0xe8] sm:$0xff]
    %v239 = vld [vmem:[#allocation2 + $0xf0] sm:$0xff]
    %v240 = vld [vmem:[#allocation2 + $0xf8] sm:$0xff]
    %v241 = vld [vmem:[#allocation2 + $0x100] sm:$0xff]
    %v242 = vld [vmem:[#allocation2 + $0x108] sm:$0xff]
    %v243 = vld [vmem:[#allocation2 + $0x110] sm:$0xff]
    %v244 = vld [vmem:[#allocation2 + $0x118] sm:$0xff]
    %v245 = vld [vmem:[#allocation2 + $0x120] sm:$0xff]
    %v246 = vld [vmem:[#allocation2 + $0x128] sm:$0xff]
    %v247 = vld [vmem:[#allocation2 + $0x130] sm:$0xff]
    %v248 = vld [vmem:[#allocation2 + $0x138] sm:$0xff]
    %v249 = vld [vmem:[#allocation2 + $0x140] sm:$0xff]
    %v250 = vld [vmem:[#allocation2 + $0x148] sm:$0xff]
    %v251 = vld [vmem:[#allocation2 + $0x150] sm:$0xff]
    %v252 = vld [vmem:[#allocation2 + $0x158] sm:$0xff]
    %v253 = vld [vmem:[#allocation2 + $0x160] sm:$0xff]
    %v254 = vld [vmem:[#allocation2 + $0x168] sm:$0xff]
    %v255 = vld [vmem:[#allocation2 + $0x170] sm:$0xff]
    %v256 = vld [vmem:[#allocation2 + $0x178] sm:$0xff]
    %v257 = vld [vmem:[#allocation2 + $0x180] sm:$0xff]
    %v258 = vld [vmem:[#allocation2 + $0x188] sm:$0xff]
    %v259 = vld [vmem:[#allocation2 + $0x190] sm:$0xff]
    %v260 = vld [vmem:[#allocation2 + $0x198] sm:$0xff]
    %v261 = vld [vmem:[#allocation2 + $0x1a0] sm:$0xff]
    %v262 = vld [vmem:[#allocation2 + $0x1a8] sm:$0xff]
    %v263 = vld [vmem:[#allocation2 + $0x1b0] sm:$0xff]
    %v264 = vld [vmem:[#allocation2 + $0x1b8] sm:$0xff]
    %v265 = vld [vmem:[#allocation2 + $0x1c0] sm:$0xff]
    %v266 = vld [vmem:[#allocation2 + $0x1c8] sm:$0xff]
    %v267 = vld [vmem:[#allocation2 + $0x1d0] sm:$0xff]
    %v268 = vld [vmem:[#allocation2 + $0x1d8] sm:$0xff]
    %v269 = vld [vmem:[#allocation2 + $0x1e0] sm:$0xff]
    %v270 = vld [vmem:[#allocation2 + $0x1e8] sm:$0xff]
    %v271 = vld [vmem:[#allocation2 + $0x1f0] sm:$0xff]
    %v272 = vld [vmem:[#allocation2 + $0x1f8] sm:$0xff]
    %v273 = vld [vmem:[#allocation2 + $0x200] sm:$0xff]
    %v274 = vld [vmem:[#allocation2 + $0x208] sm:$0xff]
    %v275 = vld [vmem:[#allocation2 + $0x210] sm:$0xff]
    %v276 = vld [vmem:[#allocation2 + $0x218] sm:$0xff]
    %v277 = vld [vmem:[#allocation2 + $0x220] sm:$0xff]
    %v278 = vld [vmem:[#allocation2 + $0x228] sm:$0xff]
    %v279 = vld [vmem:[#allocation2 + $0x230] sm:$0xff]
    %v280 = vld [vmem:[#allocation2 + $0x238] sm:$0xff]
    %v281 = vld [vmem:[#allocation2 + $0x240] sm:$0xff]
    %v282 = vld [vmem:[#allocation2 + $0x248] sm:$0xff]
    %v283 = vld [vmem:[#allocation2 + $0x250] sm:$0xff]
    %v284 = vld [vmem:[#allocation2 + $0x258] sm:$0xff]
    %v285 = vld [vmem:[#allocation2 + $0x260] sm:$0xff]
    %v286 = vld [vmem:[#allocation2 + $0x268] sm:$0xff]
    %v287 = vld [vmem:[#allocation2 + $0x270] sm:$0xff]
    %v288 = vld [vmem:[#allocation2 + $0x278] sm:$0xff]
    %v289 = vld [vmem:[#allocation2 + $0x280] sm:$0xff]
    %v290 = vld [vmem:[#allocation2 + $0x288] sm:$0xff]
    %v291 = vld [vmem:[#allocation2 + $0x290] sm:$0xff]
    %v292 = vld [vmem:[#allocation2 + $0x298] sm:$0xff]
    %v293 = vld [vmem:[#allocation2 + $0x2a0] sm:$0xff]
    %v294 = vld [vmem:[#allocation2 + $0x2a8] sm:$0xff]
    %v295 = vld [vmem:[#allocation2 + $0x2b0] sm:$0xff]
    %v296 = vld [vmem:[#allocation2 + $0x2b8] sm:$0xff]
    %v297 = vld [vmem:[#allocation2 + $0x2c0] sm:$0xff]
    %v298 = vld [vmem:[#allocation2 + $0x2c8] sm:$0xff]
    %v299 = vld [vmem:[#allocation2 + $0x2d0] sm:$0xff]
    %v300 = vld [vmem:[#allocation2 + $0x2d8] sm:$0xff]
    %v301 = vld [vmem:[#allocation2 + $0x2e0] sm:$0xff]
    %v302 = vld [vmem:[#allocation2 + $0x2e8] sm:$0xff]
    %v303 = vld [vmem:[#allocation2 + $0x2f0] sm:$0xff]
    %v304 = vld [vmem:[#allocation2 + $0x2f8] sm:$0xff]
    %v305 = vld [vmem:[#allocation2 + $0x300] sm:$0xff]
    %v306 = vld [vmem:[#allocation2 + $0x308] sm:$0xff]
    %v307 = vld [vmem:[#allocation2 + $0x310] sm:$0xff]
    %v308 = vld [vmem:[#allocation2 + $0x318] sm:$0xff]
    %v309 = vld [vmem:[#allocation2 + $0x320] sm:$0xff]
    %v310 = vld [vmem:[#allocation2 + $0x328] sm:$0xff]
    %v311 = vld [vmem:[#allocation2 + $0x330] sm:$0xff]
    %v312 = vld [vmem:[#allocation2 + $0x338] sm:$0xff]
    %v313 = vld [vmem:[#allocation2 + $0x340] sm:$0xff]
    %v314 = vld [vmem:[#allocation2 + $0x348] sm:$0xff]
    %v315 = vld [vmem:[#allocation2 + $0x350] sm:$0xff]
    %v316 = vld [vmem:[#allocation2 + $0x358] sm:$0xff]
    %v317 = vld [vmem:[#allocation2 + $0x360] sm:$0xff]
    %v318 = vld [vmem:[#allocation2 + $0x368] sm:$0xff]
    %v319 = vld [vmem:[#allocation2 + $0x370] sm:$0xff]
    %v320 = vld [vmem:[#allocation2 + $0x378] sm:$0xff]
    %v321 = vld [vmem:[#allocation2 + $0x380] sm:$0xff]
    %v322 = vld [vmem:[#allocation2 + $0x388] sm:$0xff]
    %v323 = vld [vmem:[#allocation2 + $0x390] sm:$0xff]
    %v324 = vld [vmem:[#allocation2 + $0x398] sm:$0xff]
    %v325 = vld [vmem:[#allocation2 + $0x3a0] sm:$0xff]
    %v326 = vld [vmem:[#allocation2 + $0x3a8] sm:$0xff]
    %v327 = vld [vmem:[#allocation2 + $0x3b0] sm:$0xff]
    %v328 = vld [vmem:[#allocation2 + $0x3b8] sm:$0xff]
    %v329 = vld [vmem:[#allocation2 + $0x3c0] sm:$0xff]
    %v330 = vld [vmem:[#allocation2 + $0x3c8] sm:$0xff]
    %v331 = vld [vmem:[#allocation2 + $0x3d0] sm:$0xff]
    %v332 = vld [vmem:[#allocation2 + $0x3d8] sm:$0xff]
    %v333 = vld [vmem:[#allocation2 + $0x3e0] sm:$0xff]
    %v334 = vld [vmem:[#allocation2 + $0x3e8] sm:$0xff]
    %v335 = vld [vmem:[#allocation2 + $0x3f0] sm:$0xff]
    %v336 = vld [vmem:[#allocation2 + $0x3f8] sm:$0xff]
    %v337 = vpack.c.bf16 %v205, %v205
    %v338 = vpack.c.bf16 %v206, %v206
    %v339 = vpack.c.bf16 %v207, %v207
    %v340 = vpack.c.bf16 %v208, %v208
    %s341 = scalar_lea.vmem %s7, 1
    %v342 = vld [vmem:[%s341] ss:$8 sm:$0xf]
    %v344 = vlaneseq
    %v345 = vshrl.u32 %v344, 7
    %v346 = vsub.s32 0, %v345
    %v347 = vrot.slane %v342, %v346
    %v348 = vlaneseq
    %v349 = vshrl.u32 %v348, 7
    %v350 = vsub.s32 1, %v349
    %v351 = vrot.slane %v342, %v350
    %v352 = vlaneseq
    %v353 = vshrl.u32 %v352, 7
    %v354 = vsub.s32 2, %v353
    %v355 = vrot.slane %v342, %v354
    %v356 = vlaneseq
    %v357 = vshrl.u32 %v356, 7
    %v358 = vsub.s32 3, %v357
    %v359 = vrot.slane %v342, %v358
    %v492 = vunpack.c.l.b16 %v209
    %v493 = vunpack.c.h.b16 %v209
    %v494 = vunpack.c.l.b16 %v210
    %v495 = vunpack.c.h.b16 %v210
    %v496 = vunpack.c.l.b16 %v211
    %v497 = vunpack.c.h.b16 %v211
    %v498 = vunpack.c.l.b16 %v212
    %v499 = vunpack.c.h.b16 %v212
    %v500 = vunpack.c.l.b16 %v213
    %v501 = vunpack.c.h.b16 %v213
    %v502 = vunpack.c.l.b16 %v214
    %v503 = vunpack.c.h.b16 %v214
    %v504 = vunpack.c.l.b16 %v215
    %v505 = vunpack.c.h.b16 %v215
    %v506 = vunpack.c.l.b16 %v216
    %v507 = vunpack.c.h.b16 %v216
    %v508 = vunpack.c.l.b16 %v217
    %v509 = vunpack.c.h.b16 %v217
    %v510 = vunpack.c.l.b16 %v218
    %v511 = vunpack.c.h.b16 %v218
    %v512 = vunpack.c.l.b16 %v219
    %v513 = vunpack.c.h.b16 %v219
    %v514 = vunpack.c.l.b16 %v220
    %v515 = vunpack.c.h.b16 %v220
    %v516 = vunpack.c.l.b16 %v221
    %v517 = vunpack.c.h.b16 %v221
    %v518 = vunpack.c.l.b16 %v222
    %v519 = vunpack.c.h.b16 %v222
    %v520 = vunpack.c.l.b16 %v223
    %v521 = vunpack.c.h.b16 %v223
    %v522 = vunpack.c.l.b16 %v224
    %v523 = vunpack.c.h.b16 %v224
    %v524 = vunpack.c.l.b16 %v225
    %v525 = vunpack.c.h.b16 %v225
    %v526 = vunpack.c.l.b16 %v226
    %v527 = vunpack.c.h.b16 %v226
    %v528 = vunpack.c.l.b16 %v227
    %v529 = vunpack.c.h.b16 %v227
    %v530 = vunpack.c.l.b16 %v228
    %v531 = vunpack.c.h.b16 %v228
    %v532 = vunpack.c.l.b16 %v229
    %v533 = vunpack.c.h.b16 %v229
    %v534 = vunpack.c.l.b16 %v230
    %v535 = vunpack.c.h.b16 %v230
    %v536 = vunpack.c.l.b16 %v231
    %v537 = vunpack.c.h.b16 %v231
    %v538 = vunpack.c.l.b16 %v232
    %v539 = vunpack.c.h.b16 %v232
    %v540 = vunpack.c.l.b16 %v233
    %v541 = vunpack.c.h.b16 %v233
    %v542 = vunpack.c.l.b16 %v234
    %v543 = vunpack.c.h.b16 %v234
    %v544 = vunpack.c.l.b16 %v235
    %v545 = vunpack.c.h.b16 %v235
    %v546 = vunpack.c.l.b16 %v236
    %v547 = vunpack.c.h.b16 %v236
    %v548 = vunpack.c.l.b16 %v237
    %v549 = vunpack.c.h.b16 %v237
    %v550 = vunpack.c.l.b16 %v238
    %v551 = vunpack.c.h.b16 %v238
    %v552 = vunpack.c.l.b16 %v239
    %v553 = vunpack.c.h.b16 %v239
    %v554 = vunpack.c.l.b16 %v240
    %v555 = vunpack.c.h.b16 %v240
    %v556 = vunpack.c.l.b16 %v241
    %v557 = vunpack.c.h.b16 %v241
    %v558 = vunpack.c.l.b16 %v242
    %v559 = vunpack.c.h.b16 %v242
    %v560 = vunpack.c.l.b16 %v243
    %v561 = vunpack.c.h.b16 %v243
    %v562 = vunpack.c.l.b16 %v244
    %v563 = vunpack.c.h.b16 %v244
    %v564 = vunpack.c.l.b16 %v245
    %v565 = vunpack.c.h.b16 %v245
    %v566 = vunpack.c.l.b16 %v246
    %v567 = vunpack.c.h.b16 %v246
    %v568 = vunpack.c.l.b16 %v247
    %v569 = vunpack.c.h.b16 %v247
    %v570 = vunpack.c.l.b16 %v248
    %v571 = vunpack.c.h.b16 %v248
    %v572 = vunpack.c.l.b16 %v249
    %v573 = vunpack.c.h.b16 %v249
    %v574 = vunpack.c.l.b16 %v250
    %v575 = vunpack.c.h.b16 %v250
    %v576 = vunpack.c.l.b16 %v251
    %v577 = vunpack.c.h.b16 %v251
    %v578 = vunpack.c.l.b16 %v252
    %v579 = vunpack.c.h.b16 %v252
    %v580 = vunpack.c.l.b16 %v253
    %v581 = vunpack.c.h.b16 %v253
    %v582 = vunpack.c.l.b16 %v254
    %v583 = vunpack.c.h.b16 %v254
    %v584 = vunpack.c.l.b16 %v255
    %v585 = vunpack.c.h.b16 %v255
    %v586 = vunpack.c.l.b16 %v256
    %v587 = vunpack.c.h.b16 %v256
    %v588 = vunpack.c.l.b16 %v257
    %v589 = vunpack.c.h.b16 %v257
    %v590 = vunpack.c.l.b16 %v258
    %v591 = vunpack.c.h.b16 %v258
    %v592 = vunpack.c.l.b16 %v259
    %v593 = vunpack.c.h.b16 %v259
    %v594 = vunpack.c.l.b16 %v260
    %v595 = vunpack.c.h.b16 %v260
    %v596 = vunpack.c.l.b16 %v261
    %v597 = vunpack.c.h.b16 %v261
    %v598 = vunpack.c.l.b16 %v262
    %v599 = vunpack.c.h.b16 %v262
    %v600 = vunpack.c.l.b16 %v263
    %v601 = vunpack.c.h.b16 %v263
    %v602 = vunpack.c.l.b16 %v264
    %v603 = vunpack.c.h.b16 %v264
    %v604 = vunpack.c.l.b16 %v265
    %v605 = vunpack.c.h.b16 %v265
    %v606 = vunpack.c.l.b16 %v266
    %v607 = vunpack.c.h.b16 %v266
    %v608 = vunpack.c.l.b16 %v267
    %v609 = vunpack.c.h.b16 %v267
    %v610 = vunpack.c.l.b16 %v268
    %v611 = vunpack.c.h.b16 %v268
    %v612 = vunpack.c.l.b16 %v269
    %v613 = vunpack.c.h.b16 %v269
    %v614 = vunpack.c.l.b16 %v270
    %v615 = vunpack.c.h.b16 %v270
    %v616 = vunpack.c.l.b16 %v271
    %v617 = vunpack.c.h.b16 %v271
    %v618 = vunpack.c.l.b16 %v272
    %v619 = vunpack.c.h.b16 %v272
    %v620 = vunpack.c.l.b16 %v273
    %v621 = vunpack.c.h.b16 %v273
    %v622 = vunpack.c.l.b16 %v274
    %v623 = vunpack.c.h.b16 %v274
    %v624 = vunpack.c.l.b16 %v275
    %v625 = vunpack.c.h.b16 %v275
    %v626 = vunpack.c.l.b16 %v276
    %v627 = vunpack.c.h.b16 %v276
    %v628 = vunpack.c.l.b16 %v277
    %v629 = vunpack.c.h.b16 %v277
    %v630 = vunpack.c.l.b16 %v278
    %v631 = vunpack.c.h.b16 %v278
    %v632 = vunpack.c.l.b16 %v279
    %v633 = vunpack.c.h.b16 %v279
    %v634 = vunpack.c.l.b16 %v280
    %v635 = vunpack.c.h.b16 %v280
    %v636 = vunpack.c.l.b16 %v281
    %v637 = vunpack.c.h.b16 %v281
    %v638 = vunpack.c.l.b16 %v282
    %v639 = vunpack.c.h.b16 %v282
    %v640 = vunpack.c.l.b16 %v283
    %v641 = vunpack.c.h.b16 %v283
    %v642 = vunpack.c.l.b16 %v284
    %v643 = vunpack.c.h.b16 %v284
    %v644 = vunpack.c.l.b16 %v285
    %v645 = vunpack.c.h.b16 %v285
    %v646 = vunpack.c.l.b16 %v286
    %v647 = vunpack.c.h.b16 %v286
    %v648 = vunpack.c.l.b16 %v287
    %v649 = vunpack.c.h.b16 %v287
    %v650 = vunpack.c.l.b16 %v288
    %v651 = vunpack.c.h.b16 %v288
    %v652 = vunpack.c.l.b16 %v289
    %v653 = vunpack.c.h.b16 %v289
    %v654 = vunpack.c.l.b16 %v290
    %v655 = vunpack.c.h.b16 %v290
    %v656 = vunpack.c.l.b16 %v291
    %v657 = vunpack.c.h.b16 %v291
    %v658 = vunpack.c.l.b16 %v292
    %v659 = vunpack.c.h.b16 %v292
    %v660 = vunpack.c.l.b16 %v293
    %v661 = vunpack.c.h.b16 %v293
    %v662 = vunpack.c.l.b16 %v294
    %v663 = vunpack.c.h.b16 %v294
    %v664 = vunpack.c.l.b16 %v295
    %v665 = vunpack.c.h.b16 %v295
    %v666 = vunpack.c.l.b16 %v296
    %v667 = vunpack.c.h.b16 %v296
    %v668 = vunpack.c.l.b16 %v297
    %v669 = vunpack.c.h.b16 %v297
    %v670 = vunpack.c.l.b16 %v298
    %v671 = vunpack.c.h.b16 %v298
    %v672 = vunpack.c.l.b16 %v299
    %v673 = vunpack.c.h.b16 %v299
    %v674 = vunpack.c.l.b16 %v300
    %v675 = vunpack.c.h.b16 %v300
    %v676 = vunpack.c.l.b16 %v301
    %v677 = vunpack.c.h.b16 %v301
    %v678 = vunpack.c.l.b16 %v302
    %v679 = vunpack.c.h.b16 %v302
    %v680 = vunpack.c.l.b16 %v303
    %v681 = vunpack.c.h.b16 %v303
    %v682 = vunpack.c.l.b16 %v304
    %v683 = vunpack.c.h.b16 %v304
    %v684 = vunpack.c.l.b16 %v305
    %v685 = vunpack.c.h.b16 %v305
    %v686 = vunpack.c.l.b16 %v306
    %v687 = vunpack.c.h.b16 %v306
    %v688 = vunpack.c.l.b16 %v307
    %v689 = vunpack.c.h.b16 %v307
    %v690 = vunpack.c.l.b16 %v308
    %v691 = vunpack.c.h.b16 %v308
    %v692 = vunpack.c.l.b16 %v309
    %v693 = vunpack.c.h.b16 %v309
    %v694 = vunpack.c.l.b16 %v310
    %v695 = vunpack.c.h.b16 %v310
    %v696 = vunpack.c.l.b16 %v311
    %v697 = vunpack.c.h.b16 %v311
    %v698 = vunpack.c.l.b16 %v312
    %v699 = vunpack.c.h.b16 %v312
    %v700 = vunpack.c.l.b16 %v313
    %v701 = vunpack.c.h.b16 %v313
    %v702 = vunpack.c.l.b16 %v314
    %v703 = vunpack.c.h.b16 %v314
    %v704 = vunpack.c.l.b16 %v315
    %v705 = vunpack.c.h.b16 %v315
    %v706 = vunpack.c.l.b16 %v316
    %v707 = vunpack.c.h.b16 %v316
    %v708 = vunpack.c.l.b16 %v317
    %v709 = vunpack.c.h.b16 %v317
    %v710 = vunpack.c.l.b16 %v318
    %v711 = vunpack.c.h.b16 %v318
    %v712 = vunpack.c.l.b16 %v319
    %v713 = vunpack.c.h.b16 %v319
    %v714 = vunpack.c.l.b16 %v320
    %v715 = vunpack.c.h.b16 %v320
    %v716 = vunpack.c.l.b16 %v321
    %v717 = vunpack.c.h.b16 %v321
    %v718 = vunpack.c.l.b16 %v322
    %v719 = vunpack.c.h.b16 %v322
    %v720 = vunpack.c.l.b16 %v323
    %v721 = vunpack.c.h.b16 %v323
    %v722 = vunpack.c.l.b16 %v324
    %v723 = vunpack.c.h.b16 %v324
    %v724 = vunpack.c.l.b16 %v325
    %v725 = vunpack.c.h.b16 %v325
    %v726 = vunpack.c.l.b16 %v326
    %v727 = vunpack.c.h.b16 %v326
    %v728 = vunpack.c.l.b16 %v327
    %v729 = vunpack.c.h.b16 %v327
    %v730 = vunpack.c.l.b16 %v328
    %v731 = vunpack.c.h.b16 %v328
    %v732 = vunpack.c.l.b16 %v329
    %v733 = vunpack.c.h.b16 %v329
    %v734 = vunpack.c.l.b16 %v330
    %v735 = vunpack.c.h.b16 %v330
    %v736 = vunpack.c.l.b16 %v331
    %v737 = vunpack.c.h.b16 %v331
    %v738 = vunpack.c.l.b16 %v332
    %v739 = vunpack.c.h.b16 %v332
    %v740 = vunpack.c.l.b16 %v333
    %v741 = vunpack.c.h.b16 %v333
    %v742 = vunpack.c.l.b16 %v334
    %v743 = vunpack.c.h.b16 %v334
    %v744 = vunpack.c.l.b16 %v335
    %v745 = vunpack.c.h.b16 %v335
    %v746 = vunpack.c.l.b16 %v336
    %v747 = vunpack.c.h.b16 %v336
    %v748 = vpack.c.b16 %v496, %v492
    %v749 = vpack.c.b16 %v497, %v493
    %v750 = vpack.c.b16 %v498, %v494
    %v751 = vpack.c.b16 %v499, %v495
    %v752 = vpack.c.b16 %v504, %v500
    %v753 = vpack.c.b16 %v505, %v501
    %v754 = vpack.c.b16 %v506, %v502
    %v755 = vpack.c.b16 %v507, %v503
    %v756 = vpack.c.b16 %v512, %v508
    %v757 = vpack.c.b16 %v513, %v509
    %v758 = vpack.c.b16 %v514, %v510
    %v759 = vpack.c.b16 %v515, %v511
    %v760 = vpack.c.b16 %v520, %v516
    %v761 = vpack.c.b16 %v521, %v517
    %v762 = vpack.c.b16 %v522, %v518
    %v763 = vpack.c.b16 %v523, %v519
    %v764 = vpack.c.b16 %v528, %v524
    %v765 = vpack.c.b16 %v529, %v525
    %v766 = vpack.c.b16 %v530, %v526
    %v767 = vpack.c.b16 %v531, %v527
    %v768 = vpack.c.b16 %v536, %v532
    %v769 = vpack.c.b16 %v537, %v533
    %v770 = vpack.c.b16 %v538, %v534
    %v771 = vpack.c.b16 %v539, %v535
    %v772 = vpack.c.b16 %v544, %v540
    %v773 = vpack.c.b16 %v545, %v541
    %v774 = vpack.c.b16 %v546, %v542
    %v775 = vpack.c.b16 %v547, %v543
    %v776 = vpack.c.b16 %v552, %v548
    %v777 = vpack.c.b16 %v553, %v549
    %v778 = vpack.c.b16 %v554, %v550
    %v779 = vpack.c.b16 %v555, %v551
    %v780 = vpack.c.b16 %v560, %v556
    %v781 = vpack.c.b16 %v561, %v557
    %v782 = vpack.c.b16 %v562, %v558
    %v783 = vpack.c.b16 %v563, %v559
    %v784 = vpack.c.b16 %v568, %v564
    %v785 = vpack.c.b16 %v569, %v565
    %v786 = vpack.c.b16 %v570, %v566
    %v787 = vpack.c.b16 %v571, %v567
    %v788 = vpack.c.b16 %v576, %v572
    %v789 = vpack.c.b16 %v577, %v573
    %v790 = vpack.c.b16 %v578, %v574
    %v791 = vpack.c.b16 %v579, %v575
    %v792 = vpack.c.b16 %v584, %v580
    %v793 = vpack.c.b16 %v585, %v581
    %v794 = vpack.c.b16 %v586, %v582
    %v795 = vpack.c.b16 %v587, %v583
    %v796 = vpack.c.b16 %v592, %v588
    %v797 = vpack.c.b16 %v593, %v589
    %v798 = vpack.c.b16 %v594, %v590
    %v799 = vpack.c.b16 %v595, %v591
    %v800 = vpack.c.b16 %v600, %v596
    %v801 = vpack.c.b16 %v601, %v597
    %v802 = vpack.c.b16 %v602, %v598
    %v803 = vpack.c.b16 %v603, %v599
    %v804 = vpack.c.b16 %v608, %v604
    %v805 = vpack.c.b16 %v609, %v605
    %v806 = vpack.c.b16 %v610, %v606
    %v807 = vpack.c.b16 %v611, %v607
    %v808 = vpack.c.b16 %v616, %v612
    %v809 = vpack.c.b16 %v617, %v613
    %v810 = vpack.c.b16 %v618, %v614
    %v811 = vpack.c.b16 %v619, %v615
    %v812 = vpack.c.b16 %v624, %v620
    %v813 = vpack.c.b16 %v625, %v621
    %v814 = vpack.c.b16 %v626, %v622
    %v815 = vpack.c.b16 %v627, %v623
    %v816 = vpack.c.b16 %v632, %v628
    %v817 = vpack.c.b16 %v633, %v629
    %v818 = vpack.c.b16 %v634, %v630
    %v819 = vpack.c.b16 %v635, %v631
    %v820 = vpack.c.b16 %v640, %v636
    %v821 = vpack.c.b16 %v641, %v637
    %v822 = vpack.c.b16 %v642, %v638
    %v823 = vpack.c.b16 %v643, %v639
    %v824 = vpack.c.b16 %v648, %v644
    %v825 = vpack.c.b16 %v649, %v645
    %v826 = vpack.c.b16 %v650, %v646
    %v827 = vpack.c.b16 %v651, %v647
    %v828 = vpack.c.b16 %v656, %v652
    %v829 = vpack.c.b16 %v657, %v653
    %v830 = vpack.c.b16 %v658, %v654
    %v831 = vpack.c.b16 %v659, %v655
    %v832 = vpack.c.b16 %v664, %v660
    %v833 = vpack.c.b16 %v665, %v661
    %v834 = vpack.c.b16 %v666, %v662
    %v835 = vpack.c.b16 %v667, %v663
    %v836 = vpack.c.b16 %v672, %v668
    %v837 = vpack.c.b16 %v673, %v669
    %v838 = vpack.c.b16 %v674, %v670
    %v839 = vpack.c.b16 %v675, %v671
    %v840 = vpack.c.b16 %v680, %v676
    %v841 = vpack.c.b16 %v681, %v677
    %v842 = vpack.c.b16 %v682, %v678
    %v843 = vpack.c.b16 %v683, %v679
    %v844 = vpack.c.b16 %v688, %v684
    %v845 = vpack.c.b16 %v689, %v685
    %v846 = vpack.c.b16 %v690, %v686
    %v847 = vpack.c.b16 %v691, %v687
    %v848 = vpack.c.b16 %v696, %v692
    %v849 = vpack.c.b16 %v697, %v693
    %v850 = vpack.c.b16 %v698, %v694
    %v851 = vpack.c.b16 %v699, %v695
    %v852 = vpack.c.b16 %v704, %v700
    %v853 = vpack.c.b16 %v705, %v701
    %v854 = vpack.c.b16 %v706, %v702
    %v855 = vpack.c.b16 %v707, %v703
    %v856 = vpack.c.b16 %v712, %v708
    %v857 = vpack.c.b16 %v713, %v709
    %v858 = vpack.c.b16 %v714, %v710
    %v859 = vpack.c.b16 %v715, %v711
    %v860 = vpack.c.b16 %v720, %v716
    %v861 = vpack.c.b16 %v721, %v717
    %v862 = vpack.c.b16 %v722, %v718
    %v863 = vpack.c.b16 %v723, %v719
    %v864 = vpack.c.b16 %v728, %v724
    %v865 = vpack.c.b16 %v729, %v725
    %v866 = vpack.c.b16 %v730, %v726
    %v867 = vpack.c.b16 %v731, %v727
    %v868 = vpack.c.b16 %v736, %v732
    %v869 = vpack.c.b16 %v737, %v733
    %v870 = vpack.c.b16 %v738, %v734
    %v871 = vpack.c.b16 %v739, %v735
    %v872 = vpack.c.b16 %v744, %v740
    %v873 = vpack.c.b16 %v745, %v741
    %v874 = vpack.c.b16 %v746, %v742
    %v875 = vpack.c.b16 %v747, %v743
    %1004 = vmatprep.subr.bf16.mxu0 %v749
    %1005 = vmatpush1.bf16.msra.mxu0 %v748
    %1006 = vmatprep.subr.bf16.mxu0 %v753
    %1007 = vmatpush1.bf16.msra.mxu0 %v752
    %1008 = vmatprep.subr.bf16.mxu0 %v757
    %1009 = vmatpush1.bf16.msra.mxu0 %v756
    %1010 = vmatprep.subr.bf16.mxu0 %v761
    %1011 = vmatpush1.bf16.msra.mxu0 %v760
    %1012 = vmatprep.subr.bf16.mxu0 %v765
    %1013 = vmatpush1.bf16.msra.mxu0 %v764
    %1014 = vmatprep.subr.bf16.mxu0 %v769
    %1015 = vmatpush1.bf16.msra.mxu0 %v768
    %1016 = vmatprep.subr.bf16.mxu0 %v773
    %1017 = vmatpush1.bf16.msra.mxu0 %v772
    %1018 = vmatprep.subr.bf16.mxu0 %v777
    %1019 = vmatpush1.bf16.msra.mxu0 %v776
    %1020 = vmatprep.subr.bf16.mxu0 %v781
    %1021 = vmatpush1.bf16.msra.mxu0 %v780
    %1022 = vmatprep.subr.bf16.mxu0 %v785
    %1023 = vmatpush1.bf16.msra.mxu0 %v784
    %1024 = vmatprep.subr.bf16.mxu0 %v789
    %1025 = vmatpush1.bf16.msra.mxu0 %v788
    %1026 = vmatprep.subr.bf16.mxu0 %v793
    %1027 = vmatpush1.bf16.msra.mxu0 %v792
    %1028 = vmatprep.subr.bf16.mxu0 %v797
    %1029 = vmatpush1.bf16.msra.mxu0 %v796
    %1030 = vmatprep.subr.bf16.mxu0 %v801
    %1031 = vmatpush1.bf16.msra.mxu0 %v800
    %1032 = vmatprep.subr.bf16.mxu0 %v805
    %1033 = vmatpush1.bf16.msra.mxu0 %v804
    %1034 = vmatprep.subr.bf16.mxu0 %v809
    %1035 = vmatpush1.bf16.msra.mxu0 %v808
    %1036 = vmatprep.mubr.bf16.mxu0 %v338
    %1037 = vmatmul.mubr.bf16.gmra.mrb[0].mxu0 %v337
    %v1038 = vpop.f32.mrb[0].mxu0
    %v1039 = vadd.f32 %v347, %v1038
    %v1040 = vpop.f32.mrb[0].mxu0
    %v1041 = vadd.f32 %v351, %v1040
    %v1042 = vpop.f32.mrb[0].mxu0
    %v1043 = vpop.f32.mrb[0].mxu0
    %1044 = vdwg.mxu0
    %1045 = vmatprep.subr.bf16.mxu0 %v813
    %1046 = vmatpush1.bf16.msra.mxu0 %v812
    %1047 = vmatprep.subr.bf16.mxu0 %v817
    %1048 = vmatpush1.bf16.msra.mxu0 %v816
    %1049 = vmatprep.subr.bf16.mxu0 %v821
    %1050 = vmatpush1.bf16.msra.mxu0 %v820
    %1051 = vmatprep.subr.bf16.mxu0 %v825
    %1052 = vmatpush1.bf16.msra.mxu0 %v824
    %1053 = vmatprep.subr.bf16.mxu0 %v829
    %1054 = vmatpush1.bf16.msra.mxu0 %v828
    %1055 = vmatprep.subr.bf16.mxu0 %v833
    %1056 = vmatpush1.bf16.msra.mxu0 %v832
    %1057 = vmatprep.subr.bf16.mxu0 %v837
    %1058 = vmatpush1.bf16.msra.mxu0 %v836
    %1059 = vmatprep.subr.bf16.mxu0 %v841
    %1060 = vmatpush1.bf16.msra.mxu0 %v840
    %1061 = vmatprep.subr.bf16.mxu0 %v845
    %1062 = vmatpush1.bf16.msra.mxu0 %v844
    %1063 = vmatprep.subr.bf16.mxu0 %v849
    %1064 = vmatpush1.bf16.msra.mxu0 %v848
    %1065 = vmatprep.subr.bf16.mxu0 %v853
    %1066 = vmatpush1.bf16.msra.mxu0 %v852
    %1067 = vmatprep.subr.bf16.mxu0 %v857
    %1068 = vmatpush1.bf16.msra.mxu0 %v856
    %1069 = vmatprep.subr.bf16.mxu0 %v861
    %1070 = vmatpush1.bf16.msra.mxu0 %v860
    %1071 = vmatprep.subr.bf16.mxu0 %v865
    %1072 = vmatpush1.bf16.msra.mxu0 %v864
    %1073 = vmatprep.subr.bf16.mxu0 %v869
    %1074 = vmatpush1.bf16.msra.mxu0 %v868
    %1075 = vmatprep.subr.bf16.mxu0 %v873
    %1076 = vmatpush1.bf16.msra.mxu0 %v872
    %1077 = vmatprep.mubr.bf16.mxu0 %v340
    %1078 = vmatmul.mubr.bf16.gmra.mrb[0].mxu0 %v339
    %v1079 = vpop.f32.mrb[0].mxu0
    %v1080 = vadd.f32 %v1039, %v1079
    %v1081 = vpop.f32.mrb[0].mxu0
    %v1082 = vadd.f32 %v1041, %v1081
    %v1083 = vpop.f32.mrb[0].mxu0
    %v1084 = vpop.f32.mrb[0].mxu0
    %1085 = vdwg.mxu0
    %1086 = vmatprep.subr.bf16.mxu0 %v751
    %1087 = vmatpush1.bf16.msra.mxu0 %v750
    %1088 = vmatprep.subr.bf16.mxu0 %v755
    %1089 = vmatpush1.bf16.msra.mxu0 %v754
    %1090 = vmatprep.subr.bf16.mxu0 %v759
    %1091 = vmatpush1.bf16.msra.mxu0 %v758
    %1092 = vmatprep.subr.bf16.mxu0 %v763
    %1093 = vmatpush1.bf16.msra.mxu0 %v762
    %1094 = vmatprep.subr.bf16.mxu0 %v767
    %1095 = vmatpush1.bf16.msra.mxu0 %v766
    %1096 = vmatprep.subr.bf16.mxu0 %v771
    %1097 = vmatpush1.bf16.msra.mxu0 %v770
    %1098 = vmatprep.subr.bf16.mxu0 %v775
    %1099 = vmatpush1.bf16.msra.mxu0 %v774
    %1100 = vmatprep.subr.bf16.mxu0 %v779
    %1101 = vmatpush1.bf16.msra.mxu0 %v778
    %1102 = vmatprep.subr.bf16.mxu0 %v783
    %1103 = vmatpush1.bf16.msra.mxu0 %v782
    %1104 = vmatprep.subr.bf16.mxu0 %v787
    %1105 = vmatpush1.bf16.msra.mxu0 %v786
    %1106 = vmatprep.subr.bf16.mxu0 %v791
    %1107 = vmatpush1.bf16.msra.mxu0 %v790
    %1108 = vmatprep.subr.bf16.mxu0 %v795
    %1109 = vmatpush1.bf16.msra.mxu0 %v794
    %1110 = vmatprep.subr.bf16.mxu0 %v799
    %1111 = vmatpush1.bf16.msra.mxu0 %v798
    %1112 = vmatprep.subr.bf16.mxu0 %v803
    %1113 = vmatpush1.bf16.msra.mxu0 %v802
    %1114 = vmatprep.subr.bf16.mxu0 %v807
    %1115 = vmatpush1.bf16.msra.mxu0 %v806
    %1116 = vmatprep.subr.bf16.mxu0 %v811
    %1117 = vmatpush1.bf16.msra.mxu0 %v810
    %1118 = vmatprep.mubr.bf16.mxu0 %v338
    %1119 = vmatmul.mubr.bf16.gmra.mrb[0].mxu0 %v337
    %v1120 = vpop.f32.mrb[0].mxu0
    %v1121 = vadd.f32 %v355, %v1120
    %v1122 = vpop.f32.mrb[0].mxu0
    %v1123 = vadd.f32 %v359, %v1122
    %v1124 = vpop.f32.mrb[0].mxu0
    %v1125 = vpop.f32.mrb[0].mxu0
    %1126 = vdwg.mxu0
    %1127 = vmatprep.subr.bf16.mxu0 %v815
    %1128 = vmatpush1.bf16.msra.mxu0 %v814
    %1129 = vmatprep.subr.bf16.mxu0 %v819
    %1130 = vmatpush1.bf16.msra.mxu0 %v818
    %1131 = vmatprep.subr.bf16.mxu0 %v823
    %1132 = vmatpush1.bf16.msra.mxu0 %v822
    %1133 = vmatprep.subr.bf16.mxu0 %v827
    %1134 = vmatpush1.bf16.msra.mxu0 %v826
    %1135 = vmatprep.subr.bf16.mxu0 %v831
    %1136 = vmatpush1.bf16.msra.mxu0 %v830
    %1137 = vmatprep.subr.bf16.mxu0 %v835
    %1138 = vmatpush1.bf16.msra.mxu0 %v834
    %1139 = vmatprep.subr.bf16.mxu0 %v839
    %1140 = vmatpush1.bf16.msra.mxu0 %v838
    %1141 = vmatprep.subr.bf16.mxu0 %v843
    %1142 = vmatpush1.bf16.msra.mxu0 %v842
    %1143 = vmatprep.subr.bf16.mxu0 %v847
    %1144 = vmatpush1.bf16.msra.mxu0 %v846
    %1145 = vmatprep.subr.bf16.mxu0 %v851
    %1146 = vmatpush1.bf16.msra.mxu0 %v850
    %1147 = vmatprep.subr.bf16.mxu0 %v855
    %1148 = vmatpush1.bf16.msra.mxu0 %v854
    %1149 = vmatprep.subr.bf16.mxu0 %v859
    %1150 = vmatpush1.bf16.msra.mxu0 %v858
    %1151 = vmatprep.subr.bf16.mxu0 %v863
    %1152 = vmatpush1.bf16.msra.mxu0 %v862
    %1153 = vmatprep.subr.bf16.mxu0 %v867
    %1154 = vmatpush1.bf16.msra.mxu0 %v866
    %1155 = vmatprep.subr.bf16.mxu0 %v871
    %1156 = vmatpush1.bf16.msra.mxu0 %v870
    %1157 = vmatprep.subr.bf16.mxu0 %v875
    %1158 = vmatpush1.bf16.msra.mxu0 %v874
    %1159 = vmatprep.mubr.bf16.mxu0 %v340
    %1160 = vmatmul.mubr.bf16.gmra.mrb[0].mxu0 %v339
    %v1161 = vpop.f32.mrb[0].mxu0
    %v1162 = vadd.f32 %v1121, %v1161
    %v1163 = vpop.f32.mrb[0].mxu0
    %v1164 = vadd.f32 %v1123, %v1163
    %v1165 = vpop.f32.mrb[0].mxu0
    %v1166 = vpop.f32.mrb[0].mxu0
    %1167 = vdwg.mxu0
    %v1168 = vmax.f32 %v1080, 0.0
    %v1169 = vmax.f32 %v1082, 0.0
    %v1170 = vmax.f32 %v1162, 0.0
    %v1171 = vmax.f32 %v1164, 0.0
    %v1172 = vld [vmem:[#allocation4] sm:$0xff]
    %v1173 = vld [vmem:[#allocation4 + $0x8] sm:$0xff]
    %v1174 = vld [vmem:[#allocation4 + $0x10] sm:$0xff]
    %v1175 = vld [vmem:[#allocation4 + $0x18] sm:$0xff]
    %v1176 = vld [vmem:[#allocation4 + $0x20] sm:$0xff]
    %v1177 = vld [vmem:[#allocation4 + $0x28] sm:$0xff]
    %v1178 = vld [vmem:[#allocation4 + $0x30] sm:$0xff]
    %v1179 = vld [vmem:[#allocation4 + $0x38] sm:$0xff]
    %v1180 = vld [vmem:[#allocation4 + $0x40] sm:$0xff]
    %v1181 = vld [vmem:[#allocation4 + $0x48] sm:$0xff]
    %v1182 = vld [vmem:[#allocation4 + $0x50] sm:$0xff]
    %v1183 = vld [vmem:[#allocation4 + $0x58] sm:$0xff]
    %v1184 = vld [vmem:[#allocation4 + $0x60] sm:$0xff]
    %v1185 = vld [vmem:[#allocation4 + $0x68] sm:$0xff]
    %v1186 = vld [vmem:[#allocation4 + $0x70] sm:$0xff]
    %v1187 = vld [vmem:[#allocation4 + $0x78] sm:$0xff]
    %v1188 = vld [vmem:[#allocation4 + $0x80] sm:$0xff]
    %v1189 = vld [vmem:[#allocation4 + $0x88] sm:$0xff]
    %v1190 = vld [vmem:[#allocation4 + $0x90] sm:$0xff]
    %v1191 = vld [vmem:[#allocation4 + $0x98] sm:$0xff]
    %v1192 = vld [vmem:[#allocation4 + $0xa0] sm:$0xff]
    %v1193 = vld [vmem:[#allocation4 + $0xa8] sm:$0xff]
    %v1194 = vld [vmem:[#allocation4 + $0xb0] sm:$0xff]
    %v1195 = vld [vmem:[#allocation4 + $0xb8] sm:$0xff]
    %v1196 = vld [vmem:[#allocation4 + $0xc0] sm:$0xff]
    %v1197 = vld [vmem:[#allocation4 + $0xc8] sm:$0xff]
    %v1198 = vld [vmem:[#allocation4 + $0xd0] sm:$0xff]
    %v1199 = vld [vmem:[#allocation4 + $0xd8] sm:$0xff]
    %v1200 = vld [vmem:[#allocation4 + $0xe0] sm:$0xff]
    %v1201 = vld [vmem:[#allocation4 + $0xe8] sm:$0xff]
    %v1202 = vld [vmem:[#allocation4 + $0xf0] sm:$0xff]
    %v1203 = vld [vmem:[#allocation4 + $0xf8] sm:$0xff]
    %v1204 = vld [vmem:[#allocation4 + $0x100] sm:$0xff]
    %v1205 = vld [vmem:[#allocation4 + $0x108] sm:$0xff]
    %v1206 = vld [vmem:[#allocation4 + $0x110] sm:$0xff]
    %v1207 = vld [vmem:[#allocation4 + $0x118] sm:$0xff]
    %v1208 = vld [vmem:[#allocation4 + $0x120] sm:$0xff]
    %v1209 = vld [vmem:[#allocation4 + $0x128] sm:$0xff]
    %v1210 = vld [vmem:[#allocation4 + $0x130] sm:$0xff]
    %v1211 = vld [vmem:[#allocation4 + $0x138] sm:$0xff]
    %v1212 = vld [vmem:[#allocation4 + $0x140] sm:$0xff]
    %v1213 = vld [vmem:[#allocation4 + $0x148] sm:$0xff]
    %v1214 = vld [vmem:[#allocation4 + $0x150] sm:$0xff]
    %v1215 = vld [vmem:[#allocation4 + $0x158] sm:$0xff]
    %v1216 = vld [vmem:[#allocation4 + $0x160] sm:$0xff]
    %v1217 = vld [vmem:[#allocation4 + $0x168] sm:$0xff]
    %v1218 = vld [vmem:[#allocation4 + $0x170] sm:$0xff]
    %v1219 = vld [vmem:[#allocation4 + $0x178] sm:$0xff]
    %v1220 = vld [vmem:[#allocation4 + $0x180] sm:$0xff]
    %v1221 = vld [vmem:[#allocation4 + $0x188] sm:$0xff]
    %v1222 = vld [vmem:[#allocation4 + $0x190] sm:$0xff]
    %v1223 = vld [vmem:[#allocation4 + $0x198] sm:$0xff]
    %v1224 = vld [vmem:[#allocation4 + $0x1a0] sm:$0xff]
    %v1225 = vld [vmem:[#allocation4 + $0x1a8] sm:$0xff]
    %v1226 = vld [vmem:[#allocation4 + $0x1b0] sm:$0xff]
    %v1227 = vld [vmem:[#allocation4 + $0x1b8] sm:$0xff]
    %v1228 = vld [vmem:[#allocation4 + $0x1c0] sm:$0xff]
    %v1229 = vld [vmem:[#allocation4 + $0x1c8] sm:$0xff]
    %v1230 = vld [vmem:[#allocation4 + $0x1d0] sm:$0xff]
    %v1231 = vld [vmem:[#allocation4 + $0x1d8] sm:$0xff]
    %v1232 = vld [vmem:[#allocation4 + $0x1e0] sm:$0xff]
    %v1233 = vld [vmem:[#allocation4 + $0x1e8] sm:$0xff]
    %v1234 = vld [vmem:[#allocation4 + $0x1f0] sm:$0xff]
    %v1235 = vld [vmem:[#allocation4 + $0x1f8] sm:$0xff]
    %v1236 = vpack.c.bf16 %v1168, %v1168
    %v1237 = vpack.c.bf16 %v1169, %v1169
    %v1238 = vpack.c.bf16 %v1170, %v1170
    %v1239 = vpack.c.bf16 %v1171, %v1171
    %s1240 = scalar_lea.vmem %s7, 2
    %v1241 = vld [vmem:[%s1240] ss:$8 sm:$0x3]
    %v1243 = vlaneseq
    %v1244 = vshrl.u32 %v1243, 7
    %v1245 = vsub.s32 0, %v1244
    %v1246 = vrot.slane %v1241, %v1245
    %v1247 = vlaneseq
    %v1248 = vshrl.u32 %v1247, 7
    %v1249 = vsub.s32 1, %v1248
    %v1250 = vrot.slane %v1241, %v1249
    %v1317 = vunpack.c.l.b16 %v1172
    %v1318 = vunpack.c.h.b16 %v1172
    %v1319 = vunpack.c.l.b16 %v1173
    %v1320 = vunpack.c.h.b16 %v1173
    %v1321 = vunpack.c.l.b16 %v1174
    %v1322 = vunpack.c.h.b16 %v1174
    %v1323 = vunpack.c.l.b16 %v1175
    %v1324 = vunpack.c.h.b16 %v1175
    %v1325 = vunpack.c.l.b16 %v1176
    %v1326 = vunpack.c.h.b16 %v1176
    %v1327 = vunpack.c.l.b16 %v1177
    %v1328 = vunpack.c.h.b16 %v1177
    %v1329 = vunpack.c.l.b16 %v1178
    %v1330 = vunpack.c.h.b16 %v1178
    %v1331 = vunpack.c.l.b16 %v1179
    %v1332 = vunpack.c.h.b16 %v1179
    %v1333 = vunpack.c.l.b16 %v1180
    %v1334 = vunpack.c.h.b16 %v1180
    %v1335 = vunpack.c.l.b16 %v1181
    %v1336 = vunpack.c.h.b16 %v1181
    %v1337 = vunpack.c.l.b16 %v1182
    %v1338 = vunpack.c.h.b16 %v1182
    %v1339 = vunpack.c.l.b16 %v1183
    %v1340 = vunpack.c.h.b16 %v1183
    %v1341 = vunpack.c.l.b16 %v1184
    %v1342 = vunpack.c.h.b16 %v1184
    %v1343 = vunpack.c.l.b16 %v1185
    %v1344 = vunpack.c.h.b16 %v1185
    %v1345 = vunpack.c.l.b16 %v1186
    %v1346 = vunpack.c.h.b16 %v1186
    %v1347 = vunpack.c.l.b16 %v1187
    %v1348 = vunpack.c.h.b16 %v1187
    %v1349 = vunpack.c.l.b16 %v1188
    %v1350 = vunpack.c.h.b16 %v1188
    %v1351 = vunpack.c.l.b16 %v1189
    %v1352 = vunpack.c.h.b16 %v1189
    %v1353 = vunpack.c.l.b16 %v1190
    %v1354 = vunpack.c.h.b16 %v1190
    %v1355 = vunpack.c.l.b16 %v1191
    %v1356 = vunpack.c.h.b16 %v1191
    %v1357 = vunpack.c.l.b16 %v1192
    %v1358 = vunpack.c.h.b16 %v1192
    %v1359 = vunpack.c.l.b16 %v1193
    %v1360 = vunpack.c.h.b16 %v1193
    %v1361 = vunpack.c.l.b16 %v1194
    %v1362 = vunpack.c.h.b16 %v1194
    %v1363 = vunpack.c.l.b16 %v1195
    %v1364 = vunpack.c.h.b16 %v1195
    %v1365 = vunpack.c.l.b16 %v1196
    %v1366 = vunpack.c.h.b16 %v1196
    %v1367 = vunpack.c.l.b16 %v1197
    %v1368 = vunpack.c.h.b16 %v1197
    %v1369 = vunpack.c.l.b16 %v1198
    %v1370 = vunpack.c.h.b16 %v1198
    %v1371 = vunpack.c.l.b16 %v1199
    %v1372 = vunpack.c.h.b16 %v1199
    %v1373 = vunpack.c.l.b16 %v1200
    %v1374 = vunpack.c.h.b16 %v1200
    %v1375 = vunpack.c.l.b16 %v1201
    %v1376 = vunpack.c.h.b16 %v1201
    %v1377 = vunpack.c.l.b16 %v1202
    %v1378 = vunpack.c.h.b16 %v1202
    %v1379 = vunpack.c.l.b16 %v1203
    %v1380 = vunpack.c.h.b16 %v1203
    %v1381 = vunpack.c.l.b16 %v1204
    %v1382 = vunpack.c.h.b16 %v1204
    %v1383 = vunpack.c.l.b16 %v1205
    %v1384 = vunpack.c.h.b16 %v1205
    %v1385 = vunpack.c.l.b16 %v1206
    %v1386 = vunpack.c.h.b16 %v1206
    %v1387 = vunpack.c.l.b16 %v1207
    %v1388 = vunpack.c.h.b16 %v1207
    %v1389 = vunpack.c.l.b16 %v1208
    %v1390 = vunpack.c.h.b16 %v1208
    %v1391 = vunpack.c.l.b16 %v1209
    %v1392 = vunpack.c.h.b16 %v1209
    %v1393 = vunpack.c.l.b16 %v1210
    %v1394 = vunpack.c.h.b16 %v1210
    %v1395 = vunpack.c.l.b16 %v1211
    %v1396 = vunpack.c.h.b16 %v1211
    %v1397 = vunpack.c.l.b16 %v1212
    %v1398 = vunpack.c.h.b16 %v1212
    %v1399 = vunpack.c.l.b16 %v1213
    %v1400 = vunpack.c.h.b16 %v1213
    %v1401 = vunpack.c.l.b16 %v1214
    %v1402 = vunpack.c.h.b16 %v1214
    %v1403 = vunpack.c.l.b16 %v1215
    %v1404 = vunpack.c.h.b16 %v1215
    %v1405 = vunpack.c.l.b16 %v1216
    %v1406 = vunpack.c.h.b16 %v1216
    %v1407 = vunpack.c.l.b16 %v1217
    %v1408 = vunpack.c.h.b16 %v1217
    %v1409 = vunpack.c.l.b16 %v1218
    %v1410 = vunpack.c.h.b16 %v1218
    %v1411 = vunpack.c.l.b16 %v1219
    %v1412 = vunpack.c.h.b16 %v1219
    %v1413 = vunpack.c.l.b16 %v1220
    %v1414 = vunpack.c.h.b16 %v1220
    %v1415 = vunpack.c.l.b16 %v1221
    %v1416 = vunpack.c.h.b16 %v1221
    %v1417 = vunpack.c.l.b16 %v1222
    %v1418 = vunpack.c.h.b16 %v1222
    %v1419 = vunpack.c.l.b16 %v1223
    %v1420 = vunpack.c.h.b16 %v1223
    %v1421 = vunpack.c.l.b16 %v1224
    %v1422 = vunpack.c.h.b16 %v1224
    %v1423 = vunpack.c.l.b16 %v1225
    %v1424 = vunpack.c.h.b16 %v1225
    %v1425 = vunpack.c.l.b16 %v1226
    %v1426 = vunpack.c.h.b16 %v1226
    %v1427 = vunpack.c.l.b16 %v1227
    %v1428 = vunpack.c.h.b16 %v1227
    %v1429 = vunpack.c.l.b16 %v1228
    %v1430 = vunpack.c.h.b16 %v1228
    %v1431 = vunpack.c.l.b16 %v1229
    %v1432 = vunpack.c.h.b16 %v1229
    %v1433 = vunpack.c.l.b16 %v1230
    %v1434 = vunpack.c.h.b16 %v1230
    %v1435 = vunpack.c.l.b16 %v1231
    %v1436 = vunpack.c.h.b16 %v1231
    %v1437 = vunpack.c.l.b16 %v1232
    %v1438 = vunpack.c.h.b16 %v1232
    %v1439 = vunpack.c.l.b16 %v1233
    %v1440 = vunpack.c.h.b16 %v1233
    %v1441 = vunpack.c.l.b16 %v1234
    %v1442 = vunpack.c.h.b16 %v1234
    %v1443 = vunpack.c.l.b16 %v1235
    %v1444 = vunpack.c.h.b16 %v1235
    %v1445 = vpack.c.b16 %v1319, %v1317
    %v1446 = vpack.c.b16 %v1320, %v1318
    %v1447 = vpack.c.b16 %v1323, %v1321
    %v1448 = vpack.c.b16 %v1324, %v1322
    %v1449 = vpack.c.b16 %v1327, %v1325
    %v1450 = vpack.c.b16 %v1328, %v1326
    %v1451 = vpack.c.b16 %v1331, %v1329
    %v1452 = vpack.c.b16 %v1332, %v1330
    %v1453 = vpack.c.b16 %v1335, %v1333
    %v1454 = vpack.c.b16 %v1336, %v1334
    %v1455 = vpack.c.b16 %v1339, %v1337
    %v1456 = vpack.c.b16 %v1340, %v1338
    %v1457 = vpack.c.b16 %v1343, %v1341
    %v1458 = vpack.c.b16 %v1344, %v1342
    %v1459 = vpack.c.b16 %v1347, %v1345
    %v1460 = vpack.c.b16 %v1348, %v1346
    %v1461 = vpack.c.b16 %v1351, %v1349
    %v1462 = vpack.c.b16 %v1352, %v1350
    %v1463 = vpack.c.b16 %v1355, %v1353
    %v1464 = vpack.c.b16 %v1356, %v1354
    %v1465 = vpack.c.b16 %v1359, %v1357
    %v1466 = vpack.c.b16 %v1360, %v1358
    %v1467 = vpack.c.b16 %v1363, %v1361
    %v1468 = vpack.c.b16 %v1364, %v1362
    %v1469 = vpack.c.b16 %v1367, %v1365
    %v1470 = vpack.c.b16 %v1368, %v1366
    %v1471 = vpack.c.b16 %v1371, %v1369
    %v1472 = vpack.c.b16 %v1372, %v1370
    %v1473 = vpack.c.b16 %v1375, %v1373
    %v1474 = vpack.c.b16 %v1376, %v1374
    %v1475 = vpack.c.b16 %v1379, %v1377
    %v1476 = vpack.c.b16 %v1380, %v1378
    %v1477 = vpack.c.b16 %v1383, %v1381
    %v1478 = vpack.c.b16 %v1384, %v1382
    %v1479 = vpack.c.b16 %v1387, %v1385
    %v1480 = vpack.c.b16 %v1388, %v1386
    %v1481 = vpack.c.b16 %v1391, %v1389
    %v1482 = vpack.c.b16 %v1392, %v1390
    %v1483 = vpack.c.b16 %v1395, %v1393
    %v1484 = vpack.c.b16 %v1396, %v1394
    %v1485 = vpack.c.b16 %v1399, %v1397
    %v1486 = vpack.c.b16 %v1400, %v1398
    %v1487 = vpack.c.b16 %v1403, %v1401
    %v1488 = vpack.c.b16 %v1404, %v1402
    %v1489 = vpack.c.b16 %v1407, %v1405
    %v1490 = vpack.c.b16 %v1408, %v1406
    %v1491 = vpack.c.b16 %v1411, %v1409
    %v1492 = vpack.c.b16 %v1412, %v1410
    %v1493 = vpack.c.b16 %v1415, %v1413
    %v1494 = vpack.c.b16 %v1416, %v1414
    %v1495 = vpack.c.b16 %v1419, %v1417
    %v1496 = vpack.c.b16 %v1420, %v1418
    %v1497 = vpack.c.b16 %v1423, %v1421
    %v1498 = vpack.c.b16 %v1424, %v1422
    %v1499 = vpack.c.b16 %v1427, %v1425
    %v1500 = vpack.c.b16 %v1428, %v1426
    %v1501 = vpack.c.b16 %v1431, %v1429
    %v1502 = vpack.c.b16 %v1432, %v1430
    %v1503 = vpack.c.b16 %v1435, %v1433
    %v1504 = vpack.c.b16 %v1436, %v1434
    %v1505 = vpack.c.b16 %v1439, %v1437
    %v1506 = vpack.c.b16 %v1440, %v1438
    %v1507 = vpack.c.b16 %v1443, %v1441
    %v1508 = vpack.c.b16 %v1444, %v1442
    %1573 = vmatprep.subr.bf16.mxu0 %v1446
    %1574 = vmatpush1.bf16.msra.mxu0 %v1445
    %1575 = vmatprep.subr.bf16.mxu0 %v1448
    %1576 = vmatpush1.bf16.msra.mxu0 %v1447
    %1577 = vmatprep.subr.bf16.mxu0 %v1450
    %1578 = vmatpush1.bf16.msra.mxu0 %v1449
    %1579 = vmatprep.subr.bf16.mxu0 %v1452
    %1580 = vmatpush1.bf16.msra.mxu0 %v1451
    %1581 = vmatprep.subr.bf16.mxu0 %v1454
    %1582 = vmatpush1.bf16.msra.mxu0 %v1453
    %1583 = vmatprep.subr.bf16.mxu0 %v1456
    %1584 = vmatpush1.bf16.msra.mxu0 %v1455
    %1585 = vmatprep.subr.bf16.mxu0 %v1458
    %1586 = vmatpush1.bf16.msra.mxu0 %v1457
    %1587 = vmatprep.subr.bf16.mxu0 %v1460
    %1588 = vmatpush1.bf16.msra.mxu0 %v1459
    %1589 = vmatprep.subr.bf16.mxu0 %v1462
    %1590 = vmatpush1.bf16.msra.mxu0 %v1461
    %1591 = vmatprep.subr.bf16.mxu0 %v1464
    %1592 = vmatpush1.bf16.msra.mxu0 %v1463
    %1593 = vmatprep.subr.bf16.mxu0 %v1466
    %1594 = vmatpush1.bf16.msra.mxu0 %v1465
    %1595 = vmatprep.subr.bf16.mxu0 %v1468
    %1596 = vmatpush1.bf16.msra.mxu0 %v1467
    %1597 = vmatprep.subr.bf16.mxu0 %v1470
    %1598 = vmatpush1.bf16.msra.mxu0 %v1469
    %1599 = vmatprep.subr.bf16.mxu0 %v1472
    %1600 = vmatpush1.bf16.msra.mxu0 %v1471
    %1601 = vmatprep.subr.bf16.mxu0 %v1474
    %1602 = vmatpush1.bf16.msra.mxu0 %v1473
    %1603 = vmatprep.subr.bf16.mxu0 %v1476
    %1604 = vmatpush1.bf16.msra.mxu0 %v1475
    %1605 = vmatprep.mubr.bf16.mxu0 %v1237
    %1606 = vmatmul.mubr.bf16.gmra.mrb[0].mxu0 %v1236
    %v1607 = vpop.f32.mrb[0].mxu0
    %v1608 = vadd.f32 %v1246, %v1607
    %v1609 = vpop.f32.mrb[0].mxu0
    %v1610 = vadd.f32 %v1250, %v1609
    %v1611 = vpop.f32.mrb[0].mxu0
    %v1612 = vpop.f32.mrb[0].mxu0
    %1613 = vdwg.mxu0
    %1614 = vmatprep.subr.bf16.mxu0 %v1478
    %1615 = vmatpush1.bf16.msra.mxu0 %v1477
    %1616 = vmatprep.subr.bf16.mxu0 %v1480
    %1617 = vmatpush1.bf16.msra.mxu0 %v1479
    %1618 = vmatprep.subr.bf16.mxu0 %v1482
    %1619 = vmatpush1.bf16.msra.mxu0 %v1481
    %1620 = vmatprep.subr.bf16.mxu0 %v1484
    %1621 = vmatpush1.bf16.msra.mxu0 %v1483
    %1622 = vmatprep.subr.bf16.mxu0 %v1486
    %1623 = vmatpush1.bf16.msra.mxu0 %v1485
    %1624 = vmatprep.subr.bf16.mxu0 %v1488
    %1625 = vmatpush1.bf16.msra.mxu0 %v1487
    %1626 = vmatprep.subr.bf16.mxu0 %v1490
    %1627 = vmatpush1.bf16.msra.mxu0 %v1489
    %1628 = vmatprep.subr.bf16.mxu0 %v1492
    %1629 = vmatpush1.bf16.msra.mxu0 %v1491
    %1630 = vmatprep.subr.bf16.mxu0 %v1494
    %1631 = vmatpush1.bf16.msra.mxu0 %v1493
    %1632 = vmatprep.subr.bf16.mxu0 %v1496
    %1633 = vmatpush1.bf16.msra.mxu0 %v1495
    %1634 = vmatprep.subr.bf16.mxu0 %v1498
    %1635 = vmatpush1.bf16.msra.mxu0 %v1497
    %1636 = vmatprep.subr.bf16.mxu0 %v1500
    %1637 = vmatpush1.bf16.msra.mxu0 %v1499
    %1638 = vmatprep.subr.bf16.mxu0 %v1502
    %1639 = vmatpush1.bf16.msra.mxu0 %v1501
    %1640 = vmatprep.subr.bf16.mxu0 %v1504
    %1641 = vmatpush1.bf16.msra.mxu0 %v1503
    %1642 = vmatprep.subr.bf16.mxu0 %v1506
    %1643 = vmatpush1.bf16.msra.mxu0 %v1505
    %1644 = vmatprep.subr.bf16.mxu0 %v1508
    %1645 = vmatpush1.bf16.msra.mxu0 %v1507
    %1646 = vmatprep.mubr.bf16.mxu0 %v1239
    %1647 = vmatmul.mubr.bf16.gmra.mrb[0].mxu0 %v1238
    %v1648 = vpop.f32.mrb[0].mxu0
    %v1649 = vadd.f32 %v1608, %v1648
    %v1650 = vpop.f32.mrb[0].mxu0
    %v1651 = vadd.f32 %v1610, %v1650
    %v1652 = vpop.f32.mrb[0].mxu0
    %v1653 = vpop.f32.mrb[0].mxu0
    %1654 = vdwg.mxu0
    %v1655 = vmax.f32 %v1649, 0.0
    %v1656 = vmax.f32 %v1651, 0.0
    %v1657 = vld [vmem:[%s6] sm:$0xf]
    %v1658 = vld [vmem:[%s6 + $0x4] sm:$0xf]
    %v1659 = vld [vmem:[%s6 + $0x8] sm:$0xf]
    %v1660 = vld [vmem:[%s6 + $0xc] sm:$0xf]
    %v1661 = vld [vmem:[%s6 + $0x10] sm:$0xf]
    %v1662 = vld [vmem:[%s6 + $0x14] sm:$0xf]
    %v1663 = vld [vmem:[%s6 + $0x18] sm:$0xf]
    %v1664 = vld [vmem:[%s6 + $0x1c] sm:$0xf]
    %v1665 = vld [vmem:[%s6 + $0x20] sm:$0xf]
    %v1666 = vld [vmem:[%s6 + $0x24] sm:$0xf]
    %v1667 = vld [vmem:[%s6 + $0x28] sm:$0xf]
    %v1668 = vld [vmem:[%s6 + $0x2c] sm:$0xf]
    %v1669 = vld [vmem:[%s6 + $0x30] sm:$0xf]
    %v1670 = vld [vmem:[%s6 + $0x34] sm:$0xf]
    %v1671 = vld [vmem:[%s6 + $0x38] sm:$0xf]
    %v1672 = vld [vmem:[%s6 + $0x3c] sm:$0xf]
    %v1673 = vld [vmem:[%s6 + $0x40] sm:$0xf]
    %v1674 = vld [vmem:[%s6 + $0x44] sm:$0xf]
    %v1675 = vld [vmem:[%s6 + $0x48] sm:$0xf]
    %v1676 = vld [vmem:[%s6 + $0x4c] sm:$0xf]
    %v1677 = vld [vmem:[%s6 + $0x50] sm:$0xf]
    %v1678 = vld [vmem:[%s6 + $0x54] sm:$0xf]
    %v1679 = vld [vmem:[%s6 + $0x58] sm:$0xf]
    %v1680 = vld [vmem:[%s6 + $0x5c] sm:$0xf]
    %v1681 = vld [vmem:[%s6 + $0x60] sm:$0xf]
    %v1682 = vld [vmem:[%s6 + $0x64] sm:$0xf]
    %v1683 = vld [vmem:[%s6 + $0x68] sm:$0xf]
    %v1684 = vld [vmem:[%s6 + $0x6c] sm:$0xf]
    %v1685 = vld [vmem:[%s6 + $0x70] sm:$0xf]
    %v1686 = vld [vmem:[%s6 + $0x74] sm:$0xf]
    %v1687 = vld [vmem:[%s6 + $0x78] sm:$0xf]
    %v1688 = vld [vmem:[%s6 + $0x7c] sm:$0xf]
    %v1689 = vpack.c.bf16 %v1655, %v1655
    %v1690 = vpack.c.bf16 %v1656, %v1656
    %v1691 = vld [vmem:[%s7 + $0x3] ss:$0 sm:$0xff]
    %v1724 = vunpack.c.l.b16 %v1657
    %v1725 = vunpack.c.l.b16 %v1658
    %v1726 = vunpack.c.l.b16 %v1659
    %v1727 = vunpack.c.l.b16 %v1660
    %v1728 = vunpack.c.l.b16 %v1661
    %v1729 = vunpack.c.l.b16 %v1662
    %v1730 = vunpack.c.l.b16 %v1663
    %v1731 = vunpack.c.l.b16 %v1664
    %v1732 = vunpack.c.l.b16 %v1665
    %v1733 = vunpack.c.l.b16 %v1666
    %v1734 = vunpack.c.l.b16 %v1667
    %v1735 = vunpack.c.l.b16 %v1668
    %v1736 = vunpack.c.l.b16 %v1669
    %v1737 = vunpack.c.l.b16 %v1670
    %v1738 = vunpack.c.l.b16 %v1671
    %v1739 = vunpack.c.l.b16 %v1672
    %v1740 = vunpack.c.l.b16 %v1673
    %v1741 = vunpack.c.l.b16 %v1674
    %v1742 = vunpack.c.l.b16 %v1675
    %v1743 = vunpack.c.l.b16 %v1676
    %v1744 = vunpack.c.l.b16 %v1677
    %v1745 = vunpack.c.l.b16 %v1678
    %v1746 = vunpack.c.l.b16 %v1679
    %v1747 = vunpack.c.l.b16 %v1680
    %v1748 = vunpack.c.l.b16 %v1681
    %v1749 = vunpack.c.l.b16 %v1682
    %v1750 = vunpack.c.l.b16 %v1683
    %v1751 = vunpack.c.l.b16 %v1684
    %v1752 = vunpack.c.l.b16 %v1685
    %v1753 = vunpack.c.l.b16 %v1686
    %v1754 = vunpack.c.l.b16 %v1687
    %v1755 = vunpack.c.l.b16 %v1688
    %v1756 = vpack.c.b16 %v1725, %v1724
    %v1757 = vpack.c.b16 %v1727, %v1726
    %v1758 = vpack.c.b16 %v1729, %v1728
    %v1759 = vpack.c.b16 %v1731, %v1730
    %v1760 = vpack.c.b16 %v1733, %v1732
    %v1761 = vpack.c.b16 %v1735, %v1734
    %v1762 = vpack.c.b16 %v1737, %v1736
    %v1763 = vpack.c.b16 %v1739, %v1738
    %v1764 = vpack.c.b16 %v1741, %v1740
    %v1765 = vpack.c.b16 %v1743, %v1742
    %v1766 = vpack.c.b16 %v1745, %v1744
    %v1767 = vpack.c.b16 %v1747, %v1746
    %v1768 = vpack.c.b16 %v1749, %v1748
    %v1769 = vpack.c.b16 %v1751, %v1750
    %v1770 = vpack.c.b16 %v1753, %v1752
    %v1771 = vpack.c.b16 %v1755, %v1754
    %1788 = vmatprep.subr.bf16.mxu0 0
    %1789 = vmatpush1.bf16.msra.mxu0 %v1756
    %1790 = vmatprep.subr.bf16.mxu0 0
    %1791 = vmatpush1.bf16.msra.mxu0 %v1757
    %1792 = vmatprep.subr.bf16.mxu0 0
    %1793 = vmatpush1.bf16.msra.mxu0 %v1758
    %1794 = vmatprep.subr.bf16.mxu0 0
    %1795 = vmatpush1.bf16.msra.mxu0 %v1759
    %1796 = vmatprep.subr.bf16.mxu0 0
    %1797 = vmatpush1.bf16.msra.mxu0 %v1760
    %1798 = vmatprep.subr.bf16.mxu0 0
    %1799 = vmatpush1.bf16.msra.mxu0 %v1761
    %1800 = vmatprep.subr.bf16.mxu0 0
    %1801 = vmatpush1.bf16.msra.mxu0 %v1762
    %1802 = vmatprep.subr.bf16.mxu0 0
    %1803 = vmatpush1.bf16.msra.mxu0 %v1763
    %1804 = vmatprep.subr.bf16.mxu0 0
    %1805 = vmatpush1.bf16.msra.mxu0 %v1764
    %1806 = vmatprep.subr.bf16.mxu0 0
    %1807 = vmatpush1.bf16.msra.mxu0 %v1765
    %1808 = vmatprep.subr.bf16.mxu0 0
    %1809 = vmatpush1.bf16.msra.mxu0 %v1766
    %1810 = vmatprep.subr.bf16.mxu0 0
    %1811 = vmatpush1.bf16.msra.mxu0 %v1767
    %1812 = vmatprep.subr.bf16.mxu0 0
    %1813 = vmatpush1.bf16.msra.mxu0 %v1768
    %1814 = vmatprep.subr.bf16.mxu0 0
    %1815 = vmatpush1.bf16.msra.mxu0 %v1769
    %1816 = vmatprep.subr.bf16.mxu0 0
    %1817 = vmatpush1.bf16.msra.mxu0 %v1770
    %1818 = vmatprep.subr.bf16.mxu0 0
    %1819 = vmatpush1.bf16.msra.mxu0 %v1771
    %1820 = vmatprep.mubr.bf16.mxu0 %v1690
    %1821 = vmatmul.mubr.bf16.gmra.mrb[0].mxu0 %v1689
    %v1822 = vpop.f32.mrb[0].mxu0
    %v1823 = vadd.f32 %v1691, %v1822
    %v1824 = vpop.f32.mrb[0].mxu0
    %v1825 = vpop.f32.mrb[0].mxu0
    %v1826 = vpop.f32.mrb[0].mxu0
    %1827 = vdwg.mxu0
    %v1828 = vmax.f32 %v1823, 0.0
    %v1829 = vmul.f32 %v1828, 0.5
    %v1830 = vmul.f32 %v1829, 1.442695
    %v1831 = vpow.pop %v1830
    %v1832 = vld [vmem:[%s1] sm:$0x3]
    %1834 = vrot.lane.b32.xlu0 %v1831, 120
    %v1835 = vpop.permute.xlu0 %1834
    %v1837 = vmul.f32 %v1832, %v1835
    %v1838 = vadd.f32 %v1828, %v1837
    %v1839 = vld [vmem:[%s5 + $0x20] sm:$0xff]
    %v1840 = vpack.c.bf16 %v1838, %v1838
    %s1841 = scalar_lea.vmem %s7, 4
    %v1842 = vld [vmem:[%s1841] ss:$8 sm:$0x3]
    %v1844 = vlaneseq
    %v1845 = vshrl.u32 %v1844, 7
    %v1846 = vsub.s32 0, %v1845
    %v1847 = vrot.slane %v1842, %v1846
    %v1848 = vlaneseq
    %v1849 = vshrl.u32 %v1848, 7
    %v1850 = vsub.s32 1, %v1849
    %v1851 = vrot.slane %v1842, %v1850
    %v1855 = vunpack.c.l.b16 %v1839
    %v1856 = vunpack.c.h.b16 %v1839
    %v1857 = vpack.c.b16 %v1855, %v1855
    %v1858 = vpack.c.b16 %v1856, %v1856
    %vm1859 = vcmask 64512
    %v1861 = vsel %vm1859, %v1840, 0
    %vm1863 = vcmask 1043456
    %v1865 = vsel %vm1863, %v1857, 0
    %v1868 = vsel %vm1863, %v1858, 0
    %1870 = vmatprep.subr.bf16.mxu0 %v1868
    %1871 = vmatpush1.bf16.msra.mxu0 %v1865
    %1872 = vmatprep.subr.bf16.mxu0 0
    %1873 = vmatpush1.bf16.msra.mxu0 0
    %1874 = vmatprep.subr.bf16.mxu0 0
    %1875 = vmatpush1.bf16.msra.mxu0 0
    %1876 = vmatprep.subr.bf16.mxu0 0
    %1877 = vmatpush1.bf16.msra.mxu0 0
    %1878 = vmatprep.subr.bf16.mxu0 0
    %1879 = vmatpush1.bf16.msra.mxu0 0
    %1880 = vmatprep.subr.bf16.mxu0 0
    %1881 = vmatpush1.bf16.msra.mxu0 0
    %1882 = vmatprep.subr.bf16.mxu0 0
    %1883 = vmatpush1.bf16.msra.mxu0 0
    %1884 = vmatprep.subr.bf16.mxu0 0
    %1885 = vmatpush1.bf16.msra.mxu0 0
    %1886 = vmatprep.subr.bf16.mxu0 0
    %1887 = vmatpush1.bf16.msra.mxu0 0
    %1888 = vmatprep.subr.bf16.mxu0 0
    %1889 = vmatpush1.bf16.msra.mxu0 0
    %1890 = vmatprep.subr.bf16.mxu0 0
    %1891 = vmatpush1.bf16.msra.mxu0 0
    %1892 = vmatprep.subr.bf16.mxu0 0
    %1893 = vmatpush1.bf16.msra.mxu0 0
    %1894 = vmatprep.subr.bf16.mxu0 0
    %1895 = vmatpush1.bf16.msra.mxu0 0
    %1896 = vmatprep.subr.bf16.mxu0 0
    %1897 = vmatpush1.bf16.msra.mxu0 0
    %1898 = vmatprep.subr.bf16.mxu0 0
    %1899 = vmatpush1.bf16.msra.mxu0 0
    %1900 = vmatprep.subr.bf16.mxu0 0
    %1901 = vmatpush1.bf16.msra.mxu0 0
    %1902 = vmatprep.mubr.bf16.mxu0 0
    %1903 = vmatmul.mubr.bf16.gmra.mrb[0].mxu0 %v1861
    %v1904 = vpop.f32.mrb[0].mxu0
    %v1905 = vadd.f32 %v1847, %v1904
    %v1906 = vpop.f32.mrb[0].mxu0
    %v1907 = vadd.f32 %v1851, %v1906
    %v1908 = vpop.f32.mrb[0].mxu0
    %v1909 = vpop.f32.mrb[0].mxu0
    %1910 = vdwg.mxu0
    %v1911 = vtanh.pop %v1905
    %v1912 = vtanh.pop %v1907
    %v1913 = vld [vmem:[#allocation6] sm:$0xff]
    %v1914 = vld [vmem:[#allocation6 + $0x8] sm:$0xff]
    %v1915 = vld [vmem:[#allocation6 + $0x10] sm:$0xff]
    %v1916 = vld [vmem:[#allocation6 + $0x18] sm:$0xff]
    %v1917 = vld [vmem:[#allocation6 + $0x20] sm:$0xff]
    %v1918 = vld [vmem:[#allocation6 + $0x28] sm:$0xff]
    %v1919 = vld [vmem:[#allocation6 + $0x30] sm:$0xff]
    %v1920 = vld [vmem:[#allocation6 + $0x38] sm:$0xff]
    %v1921 = vld [vmem:[#allocation6 + $0x40] sm:$0xff]
    %v1922 = vld [vmem:[#allocation6 + $0x48] sm:$0xff]
    %v1923 = vld [vmem:[#allocation6 + $0x50] sm:$0xff]
    %v1924 = vld [vmem:[#allocation6 + $0x58] sm:$0xff]
    %v1925 = vld [vmem:[#allocation6 + $0x60] sm:$0xff]
    %v1926 = vld [vmem:[#allocation6 + $0x68] sm:$0xff]
    %v1927 = vld [vmem:[#allocation6 + $0x70] sm:$0xff]
    %v1928 = vld [vmem:[#allocation6 + $0x78] sm:$0xff]
    %v1929 = vld [vmem:[#allocation6 + $0x80] sm:$0xff]
    %v1930 = vld [vmem:[#allocation6 + $0x88] sm:$0xff]
    %v1931 = vld [vmem:[#allocation6 + $0x90] sm:$0xff]
    %v1932 = vld [vmem:[#allocation6 + $0x98] sm:$0xff]
    %v1933 = vld [vmem:[#allocation6 + $0xa0] sm:$0xff]
    %v1934 = vld [vmem:[#allocation6 + $0xa8] sm:$0xff]
    %v1935 = vld [vmem:[#allocation6 + $0xb0] sm:$0xff]
    %v1936 = vld [vmem:[#allocation6 + $0xb8] sm:$0xff]
    %v1937 = vld [vmem:[#allocation6 + $0xc0] sm:$0xff]
    %v1938 = vld [vmem:[#allocation6 + $0xc8] sm:$0xff]
    %v1939 = vld [vmem:[#allocation6 + $0xd0] sm:$0xff]
    %v1940 = vld [vmem:[#allocation6 + $0xd8] sm:$0xff]
    %v1941 = vld [vmem:[#allocation6 + $0xe0] sm:$0xff]
    %v1942 = vld [vmem:[#allocation6 + $0xe8] sm:$0xff]
    %v1943 = vld [vmem:[#allocation6 + $0xf0] sm:$0xff]
    %v1944 = vld [vmem:[#allocation6 + $0xf8] sm:$0xff]
    %v1945 = vld [vmem:[#allocation6 + $0x100] sm:$0xff]
    %v1946 = vld [vmem:[#allocation6 + $0x108] sm:$0xff]
    %v1947 = vld [vmem:[#allocation6 + $0x110] sm:$0xff]
    %v1948 = vld [vmem:[#allocation6 + $0x118] sm:$0xff]
    %v1949 = vld [vmem:[#allocation6 + $0x120] sm:$0xff]
    %v1950 = vld [vmem:[#allocation6 + $0x128] sm:$0xff]
    %v1951 = vld [vmem:[#allocation6 + $0x130] sm:$0xff]
    %v1952 = vld [vmem:[#allocation6 + $0x138] sm:$0xff]
    %v1953 = vld [vmem:[#allocation6 + $0x140] sm:$0xff]
    %v1954 = vld [vmem:[#allocation6 + $0x148] sm:$0xff]
    %v1955 = vld [vmem:[#allocation6 + $0x150] sm:$0xff]
    %v1956 = vld [vmem:[#allocation6 + $0x158] sm:$0xff]
    %v1957 = vld [vmem:[#allocation6 + $0x160] sm:$0xff]
    %v1958 = vld [vmem:[#allocation6 + $0x168] sm:$0xff]
    %v1959 = vld [vmem:[#allocation6 + $0x170] sm:$0xff]
    %v1960 = vld [vmem:[#allocation6 + $0x178] sm:$0xff]
    %v1961 = vld [vmem:[#allocation6 + $0x180] sm:$0xff]
    %v1962 = vld [vmem:[#allocation6 + $0x188] sm:$0xff]
    %v1963 = vld [vmem:[#allocation6 + $0x190] sm:$0xff]
    %v1964 = vld [vmem:[#allocation6 + $0x198] sm:$0xff]
    %v1965 = vld [vmem:[#allocation6 + $0x1a0] sm:$0xff]
    %v1966 = vld [vmem:[#allocation6 + $0x1a8] sm:$0xff]
    %v1967 = vld [vmem:[#allocation6 + $0x1b0] sm:$0xff]
    %v1968 = vld [vmem:[#allocation6 + $0x1b8] sm:$0xff]
    %v1969 = vld [vmem:[#allocation6 + $0x1c0] sm:$0xff]
    %v1970 = vld [vmem:[#allocation6 + $0x1c8] sm:$0xff]
    %v1971 = vld [vmem:[#allocation6 + $0x1d0] sm:$0xff]
    %v1972 = vld [vmem:[#allocation6 + $0x1d8] sm:$0xff]
    %v1973 = vld [vmem:[#allocation6 + $0x1e0] sm:$0xff]
    %v1974 = vld [vmem:[#allocation6 + $0x1e8] sm:$0xff]
    %v1975 = vld [vmem:[#allocation6 + $0x1f0] sm:$0xff]
    %v1976 = vld [vmem:[#allocation6 + $0x1f8] sm:$0xff]
    %v1977 = vpack.c.bf16 %v1911, %v1911
    %v1978 = vpack.c.bf16 %v1912, %v1912
    %s1979 = scalar_lea.vmem %s7, 5
    %v1980 = vld [vmem:[%s1979] ss:$8 sm:$0xf]
    %v1982 = vlaneseq
    %v1983 = vshrl.u32 %v1982, 7
    %v1984 = vsub.s32 0, %v1983
    %v1985 = vrot.slane %v1980, %v1984
    %v1986 = vlaneseq
    %v1987 = vshrl.u32 %v1986, 7
    %v1988 = vsub.s32 1, %v1987
    %v1989 = vrot.slane %v1980, %v1988
    %v1990 = vlaneseq
    %v1991 = vshrl.u32 %v1990, 7
    %v1992 = vsub.s32 2, %v1991
    %v1993 = vrot.slane %v1980, %v1992
    %v1994 = vlaneseq
    %v1995 = vshrl.u32 %v1994, 7
    %v1996 = vsub.s32 3, %v1995
    %v1997 = vrot.slane %v1980, %v1996
    %v2066 = vunpack.c.l.b16 %v1913
    %v2067 = vunpack.c.h.b16 %v1913
    %v2068 = vunpack.c.l.b16 %v1914
    %v2069 = vunpack.c.h.b16 %v1914
    %v2070 = vunpack.c.l.b16 %v1915
    %v2071 = vunpack.c.h.b16 %v1915
    %v2072 = vunpack.c.l.b16 %v1916
    %v2073 = vunpack.c.h.b16 %v1916
    %v2074 = vunpack.c.l.b16 %v1917
    %v2075 = vunpack.c.h.b16 %v1917
    %v2076 = vunpack.c.l.b16 %v1918
    %v2077 = vunpack.c.h.b16 %v1918
    %v2078 = vunpack.c.l.b16 %v1919
    %v2079 = vunpack.c.h.b16 %v1919
    %v2080 = vunpack.c.l.b16 %v1920
    %v2081 = vunpack.c.h.b16 %v1920
    %v2082 = vunpack.c.l.b16 %v1921
    %v2083 = vunpack.c.h.b16 %v1921
    %v2084 = vunpack.c.l.b16 %v1922
    %v2085 = vunpack.c.h.b16 %v1922
    %v2086 = vunpack.c.l.b16 %v1923
    %v2087 = vunpack.c.h.b16 %v1923
    %v2088 = vunpack.c.l.b16 %v1924
    %v2089 = vunpack.c.h.b16 %v1924
    %v2090 = vunpack.c.l.b16 %v1925
    %v2091 = vunpack.c.h.b16 %v1925
    %v2092 = vunpack.c.l.b16 %v1926
    %v2093 = vunpack.c.h.b16 %v1926
    %v2094 = vunpack.c.l.b16 %v1927
    %v2095 = vunpack.c.h.b16 %v1927
    %v2096 = vunpack.c.l.b16 %v1928
    %v2097 = vunpack.c.h.b16 %v1928
    %v2098 = vunpack.c.l.b16 %v1929
    %v2099 = vunpack.c.h.b16 %v1929
    %v2100 = vunpack.c.l.b16 %v1930
    %v2101 = vunpack.c.h.b16 %v1930
    %v2102 = vunpack.c.l.b16 %v1931
    %v2103 = vunpack.c.h.b16 %v1931
    %v2104 = vunpack.c.l.b16 %v1932
    %v2105 = vunpack.c.h.b16 %v1932
    %v2106 = vunpack.c.l.b16 %v1933
    %v2107 = vunpack.c.h.b16 %v1933
    %v2108 = vunpack.c.l.b16 %v1934
    %v2109 = vunpack.c.h.b16 %v1934
    %v2110 = vunpack.c.l.b16 %v1935
    %v2111 = vunpack.c.h.b16 %v1935
    %v2112 = vunpack.c.l.b16 %v1936
    %v2113 = vunpack.c.h.b16 %v1936
    %v2114 = vunpack.c.l.b16 %v1937
    %v2115 = vunpack.c.h.b16 %v1937
    %v2116 = vunpack.c.l.b16 %v1938
    %v2117 = vunpack.c.h.b16 %v1938
    %v2118 = vunpack.c.l.b16 %v1939
    %v2119 = vunpack.c.h.b16 %v1939
    %v2120 = vunpack.c.l.b16 %v1940
    %v2121 = vunpack.c.h.b16 %v1940
    %v2122 = vunpack.c.l.b16 %v1941
    %v2123 = vunpack.c.h.b16 %v1941
    %v2124 = vunpack.c.l.b16 %v1942
    %v2125 = vunpack.c.h.b16 %v1942
    %v2126 = vunpack.c.l.b16 %v1943
    %v2127 = vunpack.c.h.b16 %v1943
    %v2128 = vunpack.c.l.b16 %v1944
    %v2129 = vunpack.c.h.b16 %v1944
    %v2130 = vunpack.c.l.b16 %v1945
    %v2131 = vunpack.c.h.b16 %v1945
    %v2132 = vunpack.c.l.b16 %v1946
    %v2133 = vunpack.c.h.b16 %v1946
    %v2134 = vunpack.c.l.b16 %v1947
    %v2135 = vunpack.c.h.b16 %v1947
    %v2136 = vunpack.c.l.b16 %v1948
    %v2137 = vunpack.c.h.b16 %v1948
    %v2138 = vunpack.c.l.b16 %v1949
    %v2139 = vunpack.c.h.b16 %v1949
    %v2140 = vunpack.c.l.b16 %v1950
    %v2141 = vunpack.c.h.b16 %v1950
    %v2142 = vunpack.c.l.b16 %v1951
    %v2143 = vunpack.c.h.b16 %v1951
    %v2144 = vunpack.c.l.b16 %v1952
    %v2145 = vunpack.c.h.b16 %v1952
    %v2146 = vunpack.c.l.b16 %v1953
    %v2147 = vunpack.c.h.b16 %v1953
    %v2148 = vunpack.c.l.b16 %v1954
    %v2149 = vunpack.c.h.b16 %v1954
    %v2150 = vunpack.c.l.b16 %v1955
    %v2151 = vunpack.c.h.b16 %v1955
    %v2152 = vunpack.c.l.b16 %v1956
    %v2153 = vunpack.c.h.b16 %v1956
    %v2154 = vunpack.c.l.b16 %v1957
    %v2155 = vunpack.c.h.b16 %v1957
    %v2156 = vunpack.c.l.b16 %v1958
    %v2157 = vunpack.c.h.b16 %v1958
    %v2158 = vunpack.c.l.b16 %v1959
    %v2159 = vunpack.c.h.b16 %v1959
    %v2160 = vunpack.c.l.b16 %v1960
    %v2161 = vunpack.c.h.b16 %v1960
    %v2162 = vunpack.c.l.b16 %v1961
    %v2163 = vunpack.c.h.b16 %v1961
    %v2164 = vunpack.c.l.b16 %v1962
    %v2165 = vunpack.c.h.b16 %v1962
    %v2166 = vunpack.c.l.b16 %v1963
    %v2167 = vunpack.c.h.b16 %v1963
    %v2168 = vunpack.c.l.b16 %v1964
    %v2169 = vunpack.c.h.b16 %v1964
    %v2170 = vunpack.c.l.b16 %v1965
    %v2171 = vunpack.c.h.b16 %v1965
    %v2172 = vunpack.c.l.b16 %v1966
    %v2173 = vunpack.c.h.b16 %v1966
    %v2174 = vunpack.c.l.b16 %v1967
    %v2175 = vunpack.c.h.b16 %v1967
    %v2176 = vunpack.c.l.b16 %v1968
    %v2177 = vunpack.c.h.b16 %v1968
    %v2178 = vunpack.c.l.b16 %v1969
    %v2179 = vunpack.c.h.b16 %v1969
    %v2180 = vunpack.c.l.b16 %v1970
    %v2181 = vunpack.c.h.b16 %v1970
    %v2182 = vunpack.c.l.b16 %v1971
    %v2183 = vunpack.c.h.b16 %v1971
    %v2184 = vunpack.c.l.b16 %v1972
    %v2185 = vunpack.c.h.b16 %v1972
    %v2186 = vunpack.c.l.b16 %v1973
    %v2187 = vunpack.c.h.b16 %v1973
    %v2188 = vunpack.c.l.b16 %v1974
    %v2189 = vunpack.c.h.b16 %v1974
    %v2190 = vunpack.c.l.b16 %v1975
    %v2191 = vunpack.c.h.b16 %v1975
    %v2192 = vunpack.c.l.b16 %v1976
    %v2193 = vunpack.c.h.b16 %v1976
    %v2194 = vpack.c.b16 %v2070, %v2066
    %v2195 = vpack.c.b16 %v2071, %v2067
    %v2196 = vpack.c.b16 %v2072, %v2068
    %v2197 = vpack.c.b16 %v2073, %v2069
    %v2198 = vpack.c.b16 %v2078, %v2074
    %v2199 = vpack.c.b16 %v2079, %v2075
    %v2200 = vpack.c.b16 %v2080, %v2076
    %v2201 = vpack.c.b16 %v2081, %v2077
    %v2202 = vpack.c.b16 %v2086, %v2082
    %v2203 = vpack.c.b16 %v2087, %v2083
    %v2204 = vpack.c.b16 %v2088, %v2084
    %v2205 = vpack.c.b16 %v2089, %v2085
    %v2206 = vpack.c.b16 %v2094, %v2090
    %v2207 = vpack.c.b16 %v2095, %v2091
    %v2208 = vpack.c.b16 %v2096, %v2092
    %v2209 = vpack.c.b16 %v2097, %v2093
    %v2210 = vpack.c.b16 %v2102, %v2098
    %v2211 = vpack.c.b16 %v2103, %v2099
    %v2212 = vpack.c.b16 %v2104, %v2100
    %v2213 = vpack.c.b16 %v2105, %v2101
    %v2214 = vpack.c.b16 %v2110, %v2106
    %v2215 = vpack.c.b16 %v2111, %v2107
    %v2216 = vpack.c.b16 %v2112, %v2108
    %v2217 = vpack.c.b16 %v2113, %v2109
    %v2218 = vpack.c.b16 %v2118, %v2114
    %v2219 = vpack.c.b16 %v2119, %v2115
    %v2220 = vpack.c.b16 %v2120, %v2116
    %v2221 = vpack.c.b16 %v2121, %v2117
    %v2222 = vpack.c.b16 %v2126, %v2122
    %v2223 = vpack.c.b16 %v2127, %v2123
    %v2224 = vpack.c.b16 %v2128, %v2124
    %v2225 = vpack.c.b16 %v2129, %v2125
    %v2226 = vpack.c.b16 %v2134, %v2130
    %v2227 = vpack.c.b16 %v2135, %v2131
    %v2228 = vpack.c.b16 %v2136, %v2132
    %v2229 = vpack.c.b16 %v2137, %v2133
    %v2230 = vpack.c.b16 %v2142, %v2138
    %v2231 = vpack.c.b16 %v2143, %v2139
    %v2232 = vpack.c.b16 %v2144, %v2140
    %v2233 = vpack.c.b16 %v2145, %v2141
    %v2234 = vpack.c.b16 %v2150, %v2146
    %v2235 = vpack.c.b16 %v2151, %v2147
    %v2236 = vpack.c.b16 %v2152, %v2148
    %v2237 = vpack.c.b16 %v2153, %v2149
    %v2238 = vpack.c.b16 %v2158, %v2154
    %v2239 = vpack.c.b16 %v2159, %v2155
    %v2240 = vpack.c.b16 %v2160, %v2156
    %v2241 = vpack.c.b16 %v2161, %v2157
    %v2242 = vpack.c.b16 %v2166, %v2162
    %v2243 = vpack.c.b16 %v2167, %v2163
    %v2244 = vpack.c.b16 %v2168, %v2164
    %v2245 = vpack.c.b16 %v2169, %v2165
    %v2246 = vpack.c.b16 %v2174, %v2170
    %v2247 = vpack.c.b16 %v2175, %v2171
    %v2248 = vpack.c.b16 %v2176, %v2172
    %v2249 = vpack.c.b16 %v2177, %v2173
    %v2250 = vpack.c.b16 %v2182, %v2178
    %v2251 = vpack.c.b16 %v2183, %v2179
    %v2252 = vpack.c.b16 %v2184, %v2180
    %v2253 = vpack.c.b16 %v2185, %v2181
    %v2254 = vpack.c.b16 %v2190, %v2186
    %v2255 = vpack.c.b16 %v2191, %v2187
    %v2256 = vpack.c.b16 %v2192, %v2188
    %v2257 = vpack.c.b16 %v2193, %v2189
    %2322 = vmatprep.subr.bf16.mxu0 %v2195
    %2323 = vmatpush1.bf16.msra.mxu0 %v2194
    %2324 = vmatprep.subr.bf16.mxu0 %v2199
    %2325 = vmatpush1.bf16.msra.mxu0 %v2198
    %2326 = vmatprep.subr.bf16.mxu0 %v2203
    %2327 = vmatpush1.bf16.msra.mxu0 %v2202
    %2328 = vmatprep.subr.bf16.mxu0 %v2207
    %2329 = vmatpush1.bf16.msra.mxu0 %v2206
    %2330 = vmatprep.subr.bf16.mxu0 %v2211
    %2331 = vmatpush1.bf16.msra.mxu0 %v2210
    %2332 = vmatprep.subr.bf16.mxu0 %v2215
    %2333 = vmatpush1.bf16.msra.mxu0 %v2214
    %2334 = vmatprep.subr.bf16.mxu0 %v2219
    %2335 = vmatpush1.bf16.msra.mxu0 %v2218
    %2336 = vmatprep.subr.bf16.mxu0 %v2223
    %2337 = vmatpush1.bf16.msra.mxu0 %v2222
    %2338 = vmatprep.subr.bf16.mxu0 %v2227
    %2339 = vmatpush1.bf16.msra.mxu0 %v2226
    %2340 = vmatprep.subr.bf16.mxu0 %v2231
    %2341 = vmatpush1.bf16.msra.mxu0 %v2230
    %2342 = vmatprep.subr.bf16.mxu0 %v2235
    %2343 = vmatpush1.bf16.msra.mxu0 %v2234
    %2344 = vmatprep.subr.bf16.mxu0 %v2239
    %2345 = vmatpush1.bf16.msra.mxu0 %v2238
    %2346 = vmatprep.subr.bf16.mxu0 %v2243
    %2347 = vmatpush1.bf16.msra.mxu0 %v2242
    %2348 = vmatprep.subr.bf16.mxu0 %v2247
    %2349 = vmatpush1.bf16.msra.mxu0 %v2246
    %2350 = vmatprep.subr.bf16.mxu0 %v2251
    %2351 = vmatpush1.bf16.msra.mxu0 %v2250
    %2352 = vmatprep.subr.bf16.mxu0 %v2255
    %2353 = vmatpush1.bf16.msra.mxu0 %v2254
    %2354 = vmatprep.mubr.bf16.mxu0 %v1978
    %2355 = vmatmul.mubr.bf16.gmra.mrb[0].mxu0 %v1977
    %v2356 = vpop.f32.mrb[0].mxu0
    %v2357 = vadd.f32 %v1985, %v2356
    %v2358 = vpop.f32.mrb[0].mxu0
    %v2359 = vadd.f32 %v1989, %v2358
    %v2360 = vpop.f32.mrb[0].mxu0
    %v2361 = vpop.f32.mrb[0].mxu0
    %2362 = vdwg.mxu0
    %2363 = vmatprep.subr.bf16.mxu0 %v2197
    %2364 = vmatpush1.bf16.msra.mxu0 %v2196
    %2365 = vmatprep.subr.bf16.mxu0 %v2201
    %2366 = vmatpush1.bf16.msra.mxu0 %v2200
    %2367 = vmatprep.subr.bf16.mxu0 %v2205
    %2368 = vmatpush1.bf16.msra.mxu0 %v2204
    %2369 = vmatprep.subr.bf16.mxu0 %v2209
    %2370 = vmatpush1.bf16.msra.mxu0 %v2208
    %2371 = vmatprep.subr.bf16.mxu0 %v2213
    %2372 = vmatpush1.bf16.msra.mxu0 %v2212
    %2373 = vmatprep.subr.bf16.mxu0 %v2217
    %2374 = vmatpush1.bf16.msra.mxu0 %v2216
    %2375 = vmatprep.subr.bf16.mxu0 %v2221
    %2376 = vmatpush1.bf16.msra.mxu0 %v2220
    %2377 = vmatprep.subr.bf16.mxu0 %v2225
    %2378 = vmatpush1.bf16.msra.mxu0 %v2224
    %2379 = vmatprep.subr.bf16.mxu0 %v2229
    %2380 = vmatpush1.bf16.msra.mxu0 %v2228
    %2381 = vmatprep.subr.bf16.mxu0 %v2233
    %2382 = vmatpush1.bf16.msra.mxu0 %v2232
    %2383 = vmatprep.subr.bf16.mxu0 %v2237
    %2384 = vmatpush1.bf16.msra.mxu0 %v2236
    %2385 = vmatprep.subr.bf16.mxu0 %v2241
    %2386 = vmatpush1.bf16.msra.mxu0 %v2240
    %2387 = vmatprep.subr.bf16.mxu0 %v2245
    %2388 = vmatpush1.bf16.msra.mxu0 %v2244
    %2389 = vmatprep.subr.bf16.mxu0 %v2249
    %2390 = vmatpush1.bf16.msra.mxu0 %v2248
    %2391 = vmatprep.subr.bf16.mxu0 %v2253
    %2392 = vmatpush1.bf16.msra.mxu0 %v2252
    %2393 = vmatprep.subr.bf16.mxu0 %v2257
    %2394 = vmatpush1.bf16.msra.mxu0 %v2256
    %2395 = vmatprep.mubr.bf16.mxu0 %v1978
    %2396 = vmatmul.mubr.bf16.gmra.mrb[0].mxu0 %v1977
    %v2397 = vpop.f32.mrb[0].mxu0
    %v2398 = vadd.f32 %v1993, %v2397
    %v2399 = vpop.f32.mrb[0].mxu0
    %v2400 = vadd.f32 %v1997, %v2399
    %v2401 = vpop.f32.mrb[0].mxu0
    %v2402 = vpop.f32.mrb[0].mxu0
    %2403 = vdwg.mxu0
    %v2404 = vtanh.pop %v2357
    %v2405 = vtanh.pop %v2359
    %v2406 = vtanh.pop %v2398
    %v2407 = vtanh.pop %v2400
    %v2408 = vld [vmem:[%s6 + $0x80] sm:$0xf]
    %v2409 = vld [vmem:[%s6 + $0x84] sm:$0xf]
    %v2410 = vld [vmem:[%s6 + $0x88] sm:$0xf]
    %v2411 = vld [vmem:[%s6 + $0x8c] sm:$0xf]
    %v2412 = vld [vmem:[%s6 + $0x90] sm:$0xf]
    %v2413 = vld [vmem:[%s6 + $0x94] sm:$0xf]
    %v2414 = vld [vmem:[%s6 + $0x98] sm:$0xf]
    %v2415 = vld [vmem:[%s6 + $0x9c] sm:$0xf]
    %v2416 = vld [vmem:[%s6 + $0xa0] sm:$0xf]
    %v2417 = vld [vmem:[%s6 + $0xa4] sm:$0xf]
    %v2418 = vld [vmem:[%s6 + $0xa8] sm:$0xf]
    %v2419 = vld [vmem:[%s6 + $0xac] sm:$0xf]
    %v2420 = vld [vmem:[%s6 + $0xb0] sm:$0xf]
    %v2421 = vld [vmem:[%s6 + $0xb4] sm:$0xf]
    %v2422 = vld [vmem:[%s6 + $0xb8] sm:$0xf]
    %v2423 = vld [vmem:[%s6 + $0xbc] sm:$0xf]
    %v2424 = vld [vmem:[%s6 + $0xc0] sm:$0xf]
    %v2425 = vld [vmem:[%s6 + $0xc4] sm:$0xf]
    %v2426 = vld [vmem:[%s6 + $0xc8] sm:$0xf]
    %v2427 = vld [vmem:[%s6 + $0xcc] sm:$0xf]
    %v2428 = vld [vmem:[%s6 + $0xd0] sm:$0xf]
    %v2429 = vld [vmem:[%s6 + $0xd4] sm:$0xf]
    %v2430 = vld [vmem:[%s6 + $0xd8] sm:$0xf]
    %v2431 = vld [vmem:[%s6 + $0xdc] sm:$0xf]
    %v2432 = vld [vmem:[%s6 + $0xe0] sm:$0xf]
    %v2433 = vld [vmem:[%s6 + $0xe4] sm:$0xf]
    %v2434 = vld [vmem:[%s6 + $0xe8] sm:$0xf]
    %v2435 = vld [vmem:[%s6 + $0xec] sm:$0xf]
    %v2436 = vld [vmem:[%s6 + $0xf0] sm:$0xf]
    %v2437 = vld [vmem:[%s6 + $0xf4] sm:$0xf]
    %v2438 = vld [vmem:[%s6 + $0xf8] sm:$0xf]
    %v2439 = vld [vmem:[%s6 + $0xfc] sm:$0xf]
    %v2440 = vld [vmem:[%s6 + $0x100] sm:$0xf]
    %v2441 = vld [vmem:[%s6 + $0x104] sm:$0xf]
    %v2442 = vld [vmem:[%s6 + $0x108] sm:$0xf]
    %v2443 = vld [vmem:[%s6 + $0x10c] sm:$0xf]
    %v2444 = vld [vmem:[%s6 + $0x110] sm:$0xf]
    %v2445 = vld [vmem:[%s6 + $0x114] sm:$0xf]
    %v2446 = vld [vmem:[%s6 + $0x118] sm:$0xf]
    %v2447 = vld [vmem:[%s6 + $0x11c] sm:$0xf]
    %v2448 = vld [vmem:[%s6 + $0x120] sm:$0xf]
    %v2449 = vld [vmem:[%s6 + $0x124] sm:$0xf]
    %v2450 = vld [vmem:[%s6 + $0x128] sm:$0xf]
    %v2451 = vld [vmem:[%s6 + $0x12c] sm:$0xf]
    %v2452 = vld [vmem:[%s6 + $0x130] sm:$0xf]
    %v2453 = vld [vmem:[%s6 + $0x134] sm:$0xf]
    %v2454 = vld [vmem:[%s6 + $0x138] sm:$0xf]
    %v2455 = vld [vmem:[%s6 + $0x13c] sm:$0xf]
    %v2456 = vld [vmem:[%s6 + $0x140] sm:$0xf]
    %v2457 = vld [vmem:[%s6 + $0x144] sm:$0xf]
    %v2458 = vld [vmem:[%s6 + $0x148] sm:$0xf]
    %v2459 = vld [vmem:[%s6 + $0x14c] sm:$0xf]
    %v2460 = vld [vmem:[%s6 + $0x150] sm:$0xf]
    %v2461 = vld [vmem:[%s6 + $0x154] sm:$0xf]
    %v2462 = vld [vmem:[%s6 + $0x158] sm:$0xf]
    %v2463 = vld [vmem:[%s6 + $0x15c] sm:$0xf]
    %v2464 = vld [vmem:[%s6 + $0x160] sm:$0xf]
    %v2465 = vld [vmem:[%s6 + $0x164] sm:$0xf]
    %v2466 = vld [vmem:[%s6 + $0x168] sm:$0xf]
    %v2467 = vld [vmem:[%s6 + $0x16c] sm:$0xf]
    %v2468 = vld [vmem:[%s6 + $0x170] sm:$0xf]
    %v2469 = vld [vmem:[%s6 + $0x174] sm:$0xf]
    %v2470 = vld [vmem:[%s6 + $0x178] sm:$0xf]
    %v2471 = vld [vmem:[%s6 + $0x17c] sm:$0xf]
    %v2472 = vpack.c.bf16 %v2404, %v2404
    %v2473 = vpack.c.bf16 %v2405, %v2405
    %v2474 = vpack.c.bf16 %v2406, %v2406
    %v2475 = vpack.c.bf16 %v2407, %v2407
    %v2476 = vld [vmem:[%s7 + $0x6] ss:$0 sm:$0xff]
    %v2541 = vunpack.c.l.b16 %v2408
    %v2542 = vunpack.c.l.b16 %v2409
    %v2543 = vunpack.c.l.b16 %v2410
    %v2544 = vunpack.c.l.b16 %v2411
    %v2545 = vunpack.c.l.b16 %v2412
    %v2546 = vunpack.c.l.b16 %v2413
    %v2547 = vunpack.c.l.b16 %v2414
    %v2548 = vunpack.c.l.b16 %v2415
    %v2549 = vunpack.c.l.b16 %v2416
    %v2550 = vunpack.c.l.b16 %v2417
    %v2551 = vunpack.c.l.b16 %v2418
    %v2552 = vunpack.c.l.b16 %v2419
    %v2553 = vunpack.c.l.b16 %v2420
    %v2554 = vunpack.c.l.b16 %v2421
    %v2555 = vunpack.c.l.b16 %v2422
    %v2556 = vunpack.c.l.b16 %v2423
    %v2557 = vunpack.c.l.b16 %v2424
    %v2558 = vunpack.c.l.b16 %v2425
    %v2559 = vunpack.c.l.b16 %v2426
    %v2560 = vunpack.c.l.b16 %v2427
    %v2561 = vunpack.c.l.b16 %v2428
    %v2562 = vunpack.c.l.b16 %v2429
    %v2563 = vunpack.c.l.b16 %v2430
    %v2564 = vunpack.c.l.b16 %v2431
    %v2565 = vunpack.c.l.b16 %v2432
    %v2566 = vunpack.c.l.b16 %v2433
    %v2567 = vunpack.c.l.b16 %v2434
    %v2568 = vunpack.c.l.b16 %v2435
    %v2569 = vunpack.c.l.b16 %v2436
    %v2570 = vunpack.c.l.b16 %v2437
    %v2571 = vunpack.c.l.b16 %v2438
    %v2572 = vunpack.c.l.b16 %v2439
    %v2573 = vunpack.c.l.b16 %v2440
    %v2574 = vunpack.c.l.b16 %v2441
    %v2575 = vunpack.c.l.b16 %v2442
    %v2576 = vunpack.c.l.b16 %v2443
    %v2577 = vunpack.c.l.b16 %v2444
    %v2578 = vunpack.c.l.b16 %v2445
    %v2579 = vunpack.c.l.b16 %v2446
    %v2580 = vunpack.c.l.b16 %v2447
    %v2581 = vunpack.c.l.b16 %v2448
    %v2582 = vunpack.c.l.b16 %v2449
    %v2583 = vunpack.c.l.b16 %v2450
    %v2584 = vunpack.c.l.b16 %v2451
    %v2585 = vunpack.c.l.b16 %v2452
    %v2586 = vunpack.c.l.b16 %v2453
    %v2587 = vunpack.c.l.b16 %v2454
    %v2588 = vunpack.c.l.b16 %v2455
    %v2589 = vunpack.c.l.b16 %v2456
    %v2590 = vunpack.c.l.b16 %v2457
    %v2591 = vunpack.c.l.b16 %v2458
    %v2592 = vunpack.c.l.b16 %v2459
    %v2593 = vunpack.c.l.b16 %v2460
    %v2594 = vunpack.c.l.b16 %v2461
    %v2595 = vunpack.c.l.b16 %v2462
    %v2596 = vunpack.c.l.b16 %v2463
    %v2597 = vunpack.c.l.b16 %v2464
    %v2598 = vunpack.c.l.b16 %v2465
    %v2599 = vunpack.c.l.b16 %v2466
    %v2600 = vunpack.c.l.b16 %v2467
    %v2601 = vunpack.c.l.b16 %v2468
    %v2602 = vunpack.c.l.b16 %v2469
    %v2603 = vunpack.c.l.b16 %v2470
    %v2604 = vunpack.c.l.b16 %v2471
    %v2605 = vpack.c.b16 %v2542, %v2541
    %v2606 = vpack.c.b16 %v2544, %v2543
    %v2607 = vpack.c.b16 %v2546, %v2545
    %v2608 = vpack.c.b16 %v2548, %v2547
    %v2609 = vpack.c.b16 %v2550, %v2549
    %v2610 = vpack.c.b16 %v2552, %v2551
    %v2611 = vpack.c.b16 %v2554, %v2553
    %v2612 = vpack.c.b16 %v2556, %v2555
    %v2613 = vpack.c.b16 %v2558, %v2557
    %v2614 = vpack.c.b16 %v2560, %v2559
    %v2615 = vpack.c.b16 %v2562, %v2561
    %v2616 = vpack.c.b16 %v2564, %v2563
    %v2617 = vpack.c.b16 %v2566, %v2565
    %v2618 = vpack.c.b16 %v2568, %v2567
    %v2619 = vpack.c.b16 %v2570, %v2569
    %v2620 = vpack.c.b16 %v2572, %v2571
    %v2621 = vpack.c.b16 %v2574, %v2573
    %v2622 = vpack.c.b16 %v2576, %v2575
    %v2623 = vpack.c.b16 %v2578, %v2577
    %v2624 = vpack.c.b16 %v2580, %v2579
    %v2625 = vpack.c.b16 %v2582, %v2581
    %v2626 = vpack.c.b16 %v2584, %v2583
    %v2627 = vpack.c.b16 %v2586, %v2585
    %v2628 = vpack.c.b16 %v2588, %v2587
    %v2629 = vpack.c.b16 %v2590, %v2589
    %v2630 = vpack.c.b16 %v2592, %v2591
    %v2631 = vpack.c.b16 %v2594, %v2593
    %v2632 = vpack.c.b16 %v2596, %v2595
    %v2633 = vpack.c.b16 %v2598, %v2597
    %v2634 = vpack.c.b16 %v2600, %v2599
    %v2635 = vpack.c.b16 %v2602, %v2601
    %v2636 = vpack.c.b16 %v2604, %v2603
    %2669 = vmatprep.subr.bf16.mxu0 0
    %2670 = vmatpush1.bf16.msra.mxu0 %v2605
    %2671 = vmatprep.subr.bf16.mxu0 0
    %2672 = vmatpush1.bf16.msra.mxu0 %v2606
    %2673 = vmatprep.subr.bf16.mxu0 0
    %2674 = vmatpush1.bf16.msra.mxu0 %v2607
    %2675 = vmatprep.subr.bf16.mxu0 0
    %2676 = vmatpush1.bf16.msra.mxu0 %v2608
    %2677 = vmatprep.subr.bf16.mxu0 0
    %2678 = vmatpush1.bf16.msra.mxu0 %v2609
    %2679 = vmatprep.subr.bf16.mxu0 0
    %2680 = vmatpush1.bf16.msra.mxu0 %v2610
    %2681 = vmatprep.subr.bf16.mxu0 0
    %2682 = vmatpush1.bf16.msra.mxu0 %v2611
    %2683 = vmatprep.subr.bf16.mxu0 0
    %2684 = vmatpush1.bf16.msra.mxu0 %v2612
    %2685 = vmatprep.subr.bf16.mxu0 0
    %2686 = vmatpush1.bf16.msra.mxu0 %v2613
    %2687 = vmatprep.subr.bf16.mxu0 0
    %2688 = vmatpush1.bf16.msra.mxu0 %v2614
    %2689 = vmatprep.subr.bf16.mxu0 0
    %2690 = vmatpush1.bf16.msra.mxu0 %v2615
    %2691 = vmatprep.subr.bf16.mxu0 0
    %2692 = vmatpush1.bf16.msra.mxu0 %v2616
    %2693 = vmatprep.subr.bf16.mxu0 0
    %2694 = vmatpush1.bf16.msra.mxu0 %v2617
    %2695 = vmatprep.subr.bf16.mxu0 0
    %2696 = vmatpush1.bf16.msra.mxu0 %v2618
    %2697 = vmatprep.subr.bf16.mxu0 0
    %2698 = vmatpush1.bf16.msra.mxu0 %v2619
    %2699 = vmatprep.subr.bf16.mxu0 0
    %2700 = vmatpush1.bf16.msra.mxu0 %v2620
    %2701 = vmatprep.mubr.bf16.mxu0 %v2473
    %2702 = vmatmul.mubr.bf16.gmra.mrb[0].mxu0 %v2472
    %v2703 = vpop.f32.mrb[0].mxu0
    %v2704 = vadd.f32 %v2476, %v2703
    %v2705 = vpop.f32.mrb[0].mxu0
    %v2706 = vpop.f32.mrb[0].mxu0
    %v2707 = vpop.f32.mrb[0].mxu0
    %2708 = vdwg.mxu0
    %2709 = vmatprep.subr.bf16.mxu0 0
    %2710 = vmatpush1.bf16.msra.mxu0 %v2621
    %2711 = vmatprep.subr.bf16.mxu0 0
    %2712 = vmatpush1.bf16.msra.mxu0 %v2622
    %2713 = vmatprep.subr.bf16.mxu0 0
    %2714 = vmatpush1.bf16.msra.mxu0 %v2623
    %2715 = vmatprep.subr.bf16.mxu0 0
    %2716 = vmatpush1.bf16.msra.mxu0 %v2624
    %2717 = vmatprep.subr.bf16.mxu0 0
    %2718 = vmatpush1.bf16.msra.mxu0 %v2625
    %2719 = vmatprep.subr.bf16.mxu0 0
    %2720 = vmatpush1.bf16.msra.mxu0 %v2626
    %2721 = vmatprep.subr.bf16.mxu0 0
    %2722 = vmatpush1.bf16.msra.mxu0 %v2627
    %2723 = vmatprep.subr.bf16.mxu0 0
    %2724 = vmatpush1.bf16.msra.mxu0 %v2628
    %2725 = vmatprep.subr.bf16.mxu0 0
    %2726 = vmatpush1.bf16.msra.mxu0 %v2629
    %2727 = vmatprep.subr.bf16.mxu0 0
    %2728 = vmatpush1.bf16.msra.mxu0 %v2630
    %2729 = vmatprep.subr.bf16.mxu0 0
    %2730 = vmatpush1.bf16.msra.mxu0 %v2631
    %2731 = vmatprep.subr.bf16.mxu0 0
    %2732 = vmatpush1.bf16.msra.mxu0 %v2632
    %2733 = vmatprep.subr.bf16.mxu0 0
    %2734 = vmatpush1.bf16.msra.mxu0 %v2633
    %2735 = vmatprep.subr.bf16.mxu0 0
    %2736 = vmatpush1.bf16.msra.mxu0 %v2634
    %2737 = vmatprep.subr.bf16.mxu0 0
    %2738 = vmatpush1.bf16.msra.mxu0 %v2635
    %2739 = vmatprep.subr.bf16.mxu0 0
    %2740 = vmatpush1.bf16.msra.mxu0 %v2636
    %2741 = vmatprep.mubr.bf16.mxu0 %v2475
    %2742 = vmatmul.mubr.bf16.gmra.mrb[0].mxu0 %v2474
    %v2743 = vpop.f32.mrb[0].mxu0
    %v2744 = vadd.f32 %v2704, %v2743
    %v2745 = vpop.f32.mrb[0].mxu0
    %v2746 = vpop.f32.mrb[0].mxu0
    %v2747 = vpop.f32.mrb[0].mxu0
    %2748 = vdwg.mxu0
    %v2749 = vtanh.pop %v2744
    %2751 = vrot.lane.b32.xlu0 %v1828, 16
    %v2752 = vpop.permute.xlu0 %2751
    %v2754 = vsel %vm119, %v2749, %v2752
    %vm2755 = vcmask 195584
    %v2756 = vsel %vm2755, %v2754, %v2752
    %vm2757 = vcmask 254976
    %2758 = vst.msk [vmem:[%s8] sm:$0x3] %vm2757, %v2756
    // Predicated region
    $region46: #{vae_forward.1} parent=1 // pred_check
      _
    $region47: #{vae_forward.1} parent=1 // pred_check_branch
      %2760 = sbr.rel (0) target = $region49
    $region48: #{vae_forward.1} parent=1 // pred_region
      _
    $region49: #{vae_forward.1} parent=1 // pred_fallthru
      _
    // Predicated region
    $region50: #{vae_forward.1} parent=1 // pred_check
      _
    $region51: #{vae_forward.1} parent=1 // pred_check_branch
      %2762 = sbr.rel (0) target = $region53
    $region52: #{vae_forward.1} parent=1 // pred_region
      _
    $region53: #{vae_forward.1} parent=1 // pred_fallthru
      _
    %2763 = vsyncpa [#allocation3], 1
    %2764 = vsyncpa [#allocation5], 1

</llo_original>
